<compile_context>
chip_gen: v6e
topology: v6e:2x2x1
jax: 0.10.0
libtpu: 0.0.40
codegen_flags: <defaults>
</compile_context>

<pallas_src>
import functools

import jax
import jax.numpy as jnp
from jax import lax
from jax.experimental import pallas as pl
from jax.experimental.pallas import tpu as pltpu


def lstm_reg_kernel(x_ref,        # (S*B, I)    bf16  pre-flattened input
                    wih0t_ref,    # (I, 4H)     bf16  layer-0 input weights^T
                    whh0t_ref,    # (H, 4H)     bf16  layer-0 hidden weights^T
                    b0_ref,       # (1, 4H)     f32   layer-0 bias (b_ih + b_hh)
                    wih1t_ref,    # (H, 4H)     bf16  layer-1 input weights^T
                    whh1t_ref,    # (H, 4H)     bf16  layer-1 hidden weights^T
                    b1_ref,       # (1, 4H)     f32   layer-1 bias (b_ih + b_hh)
                    wregt_ref,    # (H, O_pad)  bf16  final linear weight^T, lane-padded
                    breg_ref,     # (1, O_pad)  f32   final linear bias, lane-padded
                    out_ref,      # (S*B, O_pad) f32
                    *, seq_len, batch, hidden):
    S, B, H = seq_len, batch, hidden
    H4 = 4 * H

    # --- One-time prologue (off the recurrence critical path) -----------------
    # Hoisted layer-0 input projection for all steps in one MXU matmul, with the
    # layer-0 bias folded in. Kept as a traced value (vregs), no VMEM scratch.
    xproj = jnp.dot(x_ref[...], wih0t_ref[...],
                    preferred_element_type=jnp.float32) + b0_ref[...]

    whh0t = whh0t_ref[...]
    wih1t = wih1t_ref[...]
    whh1t = whh1t_ref[...]
    # Hoisted bias broadcast (JAX does not CSE broadcast_in_dim inside loops).
    b1b = jnp.broadcast_to(b1_ref[...], (B, H4))

    bf16 = jnp.bfloat16

    def gates(z):
        # Full-width sigmoid / tanh: 2 EUP passes per gate-set instead of 4.
        sz = jax.nn.sigmoid(z)
        tz = jnp.tanh(z)
        return (sz[:, 0 * H:1 * H],   # i
                sz[:, 1 * H:2 * H],   # f
                tz[:, 2 * H:3 * H],   # g
                sz[:, 3 * H:4 * H])   # o

    # --- Serial time recurrence: fully unrolled, activations stay in vregs ----
    zeros = jnp.zeros((B, H), jnp.float32)
    h0, c0, h1, c1 = zeros, zeros, zeros, zeros
    h1_steps = []
    for t in range(S):
        # Layer 0: only the recurrent matmul sits on the critical path.
        z0 = xproj[t * B:(t + 1) * B, :] + jnp.dot(
            h0.astype(bf16), whh0t, preferred_element_type=jnp.float32)
        i0, f0, g0, o0 = gates(z0)
        c0 = f0 * c0 + i0 * g0
        h0 = o0 * jnp.tanh(c0)

        # Layer 1: two K=H MXU pushes instead of a per-step lane concatenate.
        z1 = (jnp.dot(h0.astype(bf16), wih1t, preferred_element_type=jnp.float32)
              + jnp.dot(h1.astype(bf16), whh1t, preferred_element_type=jnp.float32)
              + b1b)
        i1, f1, g1, o1 = gates(z1)
        c1 = f1 * c1 + i1 * g1
        h1 = o1 * jnp.tanh(c1)
        h1_steps.append(h1)          # defer the final Linear to the epilogue

    # --- Epilogue: single dense Linear + one lane-dense store -----------------
    h_all = jnp.concatenate(h1_steps, axis=0)                     # (S*B, H)
    y = jnp.dot(h_all.astype(bf16), wregt_ref[...],
                preferred_element_type=jnp.float32) + breg_ref[...]
    out_ref[...] = y


def lstm_reg_forward(x, params):
    """x: (S, B, input_size) float32 -> (S, B, output_size) float32."""
    S, B, I = x.shape
    H = params["w_hh_l0"].shape[1]
    O = params["w_reg"].shape[0]

    # Pad batch up to a full sublane tile (8) — padded rows are sliced off below.
    B_pad = max(8, ((B + 7) // 8) * 8)
    if B_pad != B:
        x = jnp.pad(x, ((0, 0), (0, B_pad - B), (0, 0)))

    # Lane-dense output width (O=1 -> 128); sliced back to O outside the kernel.
    O_pad = max(128, ((O + 127) // 128) * 128)

    bf16 = jnp.bfloat16
    # One-time prep outside the kernel: pre-flattened input, pre-transposed
    # lane-dense weights, bf16 matmul operands (biases stay f32).
    x_flat = x.reshape(S * B_pad, I).astype(bf16)                  # (S*B, I)
    wih0_t = params["w_ih_l0"].T.astype(bf16)                      # (I, 4H)
    whh0_t = params["w_hh_l0"].T.astype(bf16)                      # (H, 4H)
    wih1_t = params["w_ih_l1"].T.astype(bf16)                      # (H, 4H)
    whh1_t = params["w_hh_l1"].T.astype(bf16)                      # (H, 4H)
    wreg_t = jnp.zeros((H, O_pad), jnp.float32).at[:, :O].set(
        params["w_reg"].T).astype(bf16)                            # (H, O_pad)
    breg_p = jnp.zeros((1, O_pad), jnp.float32).at[:, :O].set(
        params["b_reg"])                                           # (1, O_pad)

    kernel = functools.partial(lstm_reg_kernel,
                               seq_len=S, batch=B_pad, hidden=H)
    vmem = pl.BlockSpec(memory_space=pltpu.MemorySpace.VMEM)
    out = pl.pallas_call(
        kernel,
        out_shape=jax.ShapeDtypeStruct((S * B_pad, O_pad), jnp.float32),
        in_specs=[vmem] * 9,
        out_specs=vmem,
    )(x_flat, wih0_t, whh0_t, params["b_l0"],
      wih1_t, whh1_t, params["b_l1"], wreg_t, breg_p)

    return out.reshape(S, B_pad, O_pad)[:, :B, :O]


def init_params(key, input_size, hidden_size, output_size):
    """Deterministic synthetic parameters matching nn.LSTM / nn.Linear shapes."""
    ks = jax.random.split(key, 11)
    H4 = 4 * hidden_size
    u = lambda k, shape, bound: jax.random.uniform(
        k, shape, jnp.float32, -bound, bound)
    s = 1.0 / jnp.sqrt(hidden_size)
    params = {
        "w_ih_l0": u(ks[0], (H4, input_size), s),
        "w_hh_l0": u(ks[1], (H4, hidden_size), s),
        # PyTorch has separate b_ih / b_hh; they only ever appear summed.
        "b_l0": (u(ks[2], (1, H4), s) + u(ks[3], (1, H4), s)),
        "w_ih_l1": u(ks[4], (H4, hidden_size), s),
        "w_hh_l1": u(ks[5], (H4, hidden_size), s),
        "b_l1": (u(ks[6], (1, H4), s) + u(ks[7], (1, H4), s)),
        "w_reg": u(ks[8], (output_size, hidden_size), s),
        "b_reg": u(ks[9], (1, output_size), s),
    }
    return params


def reference_forward(x, params):
    """Pure-JAX f32 reference (lax.scan LSTM) for correctness checking."""
    H = params["w_hh_l0"].shape[1]

    def cell(x_t, h, c, wih, whh, b):
        z = x_t @ wih.T + h @ whh.T + b[0]
        i = jax.nn.sigmoid(z[:, 0 * H:1 * H])
        f = jax.nn.sigmoid(z[:, 1 * H:2 * H])
        g = jnp.tanh(z[:, 2 * H:3 * H])
        o = jax.nn.sigmoid(z[:, 3 * H:4 * H])
        c = f * c + i * g
        return o * jnp.tanh(c), c

    B = x.shape[1]
    zeros = jnp.zeros((B, H), jnp.float32)

    def step(carry, x_t):
        h0, c0, h1, c1 = carry
        h0, c0 = cell(x_t, h0, c0, params["w_ih_l0"], params["w_hh_l0"], params["b_l0"])
        h1, c1 = cell(h0, h1, c1, params["w_ih_l1"], params["w_hh_l1"], params["b_l1"])
        return (h0, c0, h1, c1), h1

    _, hs = lax.scan(step, (zeros, zeros, zeros, zeros), x)
    return hs @ params["w_reg"].T + params["b_reg"][0]


if __name__ == "__main__":
    SEQ, BATCH = 8, 2
    INPUT_SIZE, HIDDEN_SIZE, OUTPUT_SIZE = 4, 32, 1

    key = jax.random.PRNGKey(0)
    kx, kp = jax.random.split(key)
    x = jax.random.normal(kx, (SEQ, BATCH, INPUT_SIZE), dtype=jnp.float32)
    params = init_params(kp, INPUT_SIZE, HIDDEN_SIZE, OUTPUT_SIZE)

    fwd = jax.jit(lstm_reg_forward)
    out = fwd(x, params)
    out = jax.block_until_ready(out)

    ref = reference_forward(x, params)
    assert out.shape == (SEQ, BATCH, OUTPUT_SIZE)
    # bf16 matmul operands (f32 accumulation) -> loosened tolerance vs f32 ref.
    assert jnp.allclose(out, ref, atol=3e-2, rtol=3e-2), (
        float(jnp.max(jnp.abs(out - ref))))

    print("KERNEL_OK")
</pallas_src>

<mosaic_0001>
module attributes {stable_mosaic.version = 11 : i64} {
  func.func @lstm_reg_kernel(%arg0: memref<64x4xbf16, #tpu.memory_space<vmem>>, %arg1: memref<4x128xbf16, #tpu.memory_space<vmem>>, %arg2: memref<32x128xbf16, #tpu.memory_space<vmem>>, %arg3: memref<1x128xf32, #tpu.memory_space<vmem>>, %arg4: memref<32x128xbf16, #tpu.memory_space<vmem>>, %arg5: memref<32x128xbf16, #tpu.memory_space<vmem>>, %arg6: memref<1x128xf32, #tpu.memory_space<vmem>>, %arg7: memref<32x128xbf16, #tpu.memory_space<vmem>>, %arg8: memref<1x128xf32, #tpu.memory_space<vmem>>, %arg9: memref<64x128xf32, #tpu.memory_space<vmem>>) attributes {dimension_semantics = [], scalar_prefetch = 0 : i64, scratch_operands = 0 : i64, tpu.core_type = #tpu.core_type<tc>} {
    %c0 = arith.constant 0 : index
    %c0_0 = arith.constant 0 : index
    %0 = vector.load %arg0[%c0, %c0_0] : memref<64x4xbf16, #tpu.memory_space<vmem>>, vector<64x4xbf16>
    %c0_1 = arith.constant 0 : index
    %c0_2 = arith.constant 0 : index
    %1 = vector.load %arg1[%c0_1, %c0_2] : memref<4x128xbf16, #tpu.memory_space<vmem>>, vector<4x128xbf16>
    %cst = arith.constant dense<0.000000e+00> : vector<64x128xf32>
    %2 = tpu.matmul %0, %1, %cst {dimension_numbers = #tpu.dot_dimension_numbers<[1], [0], [0], [1], [0, 0, 1, 1], [], []>} : vector<64x4xbf16>, vector<4x128xbf16>, vector<64x128xf32> -> vector<64x128xf32>
    %c0_3 = arith.constant 0 : index
    %c0_4 = arith.constant 0 : index
    %3 = vector.load %arg3[%c0_3, %c0_4] : memref<1x128xf32, #tpu.memory_space<vmem>>, vector<1x128xf32>
    %4 = vector.broadcast %3 : vector<1x128xf32> to vector<64x128xf32>
    %5 = arith.addf %2, %4 : vector<64x128xf32>
    %c0_5 = arith.constant 0 : index
    %c0_6 = arith.constant 0 : index
    %6 = vector.load %arg2[%c0_5, %c0_6] : memref<32x128xbf16, #tpu.memory_space<vmem>>, vector<32x128xbf16>
    %c0_7 = arith.constant 0 : index
    %c0_8 = arith.constant 0 : index
    %7 = vector.load %arg4[%c0_7, %c0_8] : memref<32x128xbf16, #tpu.memory_space<vmem>>, vector<32x128xbf16>
    %c0_9 = arith.constant 0 : index
    %c0_10 = arith.constant 0 : index
    %8 = vector.load %arg5[%c0_9, %c0_10] : memref<32x128xbf16, #tpu.memory_space<vmem>>, vector<32x128xbf16>
    %c0_11 = arith.constant 0 : index
    %c0_12 = arith.constant 0 : index
    %9 = vector.load %arg6[%c0_11, %c0_12] : memref<1x128xf32, #tpu.memory_space<vmem>>, vector<1x128xf32>
    %10 = vector.shape_cast %9 : vector<1x128xf32> to vector<1x128xf32>
    %11 = vector.broadcast %10 : vector<1x128xf32> to vector<8x128xf32>
    %cst_13 = arith.constant 0.000000e+00 : f32
    %12 = vector.broadcast %cst_13 : f32 to vector<8x32xf32>
    %13 = vector.extract_strided_slice %5 {offsets = [0, 0], sizes = [8, 128], strides = [1, 1]} : vector<64x128xf32> to vector<8x128xf32>
    %14 = arith.truncf %12 : vector<8x32xf32> to vector<8x32xbf16>
    %cst_14 = arith.constant dense<0.000000e+00> : vector<8x128xf32>
    %15 = tpu.matmul %14, %6, %cst_14 {dimension_numbers = #tpu.dot_dimension_numbers<[1], [0], [0], [1], [0, 0, 1, 1], [], []>} : vector<8x32xbf16>, vector<32x128xbf16>, vector<8x128xf32> -> vector<8x128xf32>
    %16 = arith.addf %13, %15 : vector<8x128xf32>
    %17 = arith.negf %16 : vector<8x128xf32>
    %18 = math.exp %17 : vector<8x128xf32>
    %cst_15 = arith.constant 1.000000e+00 : f32
    %19 = vector.broadcast %cst_15 : f32 to vector<8x128xf32>
    %20 = arith.addf %19, %18 : vector<8x128xf32>
    %21 = arith.divf %19, %20 : vector<8x128xf32>
    %22 = math.tanh %16 : vector<8x128xf32>
    %23 = vector.extract_strided_slice %21 {offsets = [0, 0], sizes = [8, 32], strides = [1, 1]} : vector<8x128xf32> to vector<8x32xf32>
    %24 = vector.extract_strided_slice %21 {offsets = [0, 32], sizes = [8, 32], strides = [1, 1]} : vector<8x128xf32> to vector<8x32xf32>
    %25 = vector.extract_strided_slice %22 {offsets = [0, 64], sizes = [8, 32], strides = [1, 1]} : vector<8x128xf32> to vector<8x32xf32>
    %26 = vector.extract_strided_slice %21 {offsets = [0, 96], sizes = [8, 32], strides = [1, 1]} : vector<8x128xf32> to vector<8x32xf32>
    %27 = arith.mulf %24, %12 : vector<8x32xf32>
    %28 = arith.mulf %23, %25 : vector<8x32xf32>
    %29 = arith.addf %27, %28 : vector<8x32xf32>
    %30 = math.tanh %29 : vector<8x32xf32>
    %31 = arith.mulf %26, %30 : vector<8x32xf32>
    %32 = arith.truncf %31 : vector<8x32xf32> to vector<8x32xbf16>
    %cst_16 = arith.constant dense<0.000000e+00> : vector<8x128xf32>
    %33 = tpu.matmul %32, %7, %cst_16 {dimension_numbers = #tpu.dot_dimension_numbers<[1], [0], [0], [1], [0, 0, 1, 1], [], []>} : vector<8x32xbf16>, vector<32x128xbf16>, vector<8x128xf32> -> vector<8x128xf32>
    %34 = arith.truncf %12 : vector<8x32xf32> to vector<8x32xbf16>
    %cst_17 = arith.constant dense<0.000000e+00> : vector<8x128xf32>
    %35 = tpu.matmul %34, %8, %cst_17 {dimension_numbers = #tpu.dot_dimension_numbers<[1], [0], [0], [1], [0, 0, 1, 1], [], []>} : vector<8x32xbf16>, vector<32x128xbf16>, vector<8x128xf32> -> vector<8x128xf32>
    %36 = arith.addf %33, %35 : vector<8x128xf32>
    %37 = arith.addf %36, %11 : vector<8x128xf32>
    %38 = arith.negf %37 : vector<8x128xf32>
    %39 = math.exp %38 : vector<8x128xf32>
    %cst_18 = arith.constant 1.000000e+00 : f32
    %40 = vector.broadcast %cst_18 : f32 to vector<8x128xf32>
    %41 = arith.addf %40, %39 : vector<8x128xf32>
    %42 = arith.divf %40, %41 : vector<8x128xf32>
    %43 = math.tanh %37 : vector<8x128xf32>
    %44 = vector.extract_strided_slice %42 {offsets = [0, 0], sizes = [8, 32], strides = [1, 1]} : vector<8x128xf32> to vector<8x32xf32>
    %45 = vector.extract_strided_slice %42 {offsets = [0, 32], sizes = [8, 32], strides = [1, 1]} : vector<8x128xf32> to vector<8x32xf32>
    %46 = vector.extract_strided_slice %43 {offsets = [0, 64], sizes = [8, 32], strides = [1, 1]} : vector<8x128xf32> to vector<8x32xf32>
    %47 = vector.extract_strided_slice %42 {offsets = [0, 96], sizes = [8, 32], strides = [1, 1]} : vector<8x128xf32> to vector<8x32xf32>
    %48 = arith.mulf %45, %12 : vector<8x32xf32>
    %49 = arith.mulf %44, %46 : vector<8x32xf32>
    %50 = arith.addf %48, %49 : vector<8x32xf32>
    %51 = math.tanh %50 : vector<8x32xf32>
    %52 = arith.mulf %47, %51 : vector<8x32xf32>
    %53 = vector.extract_strided_slice %5 {offsets = [8, 0], sizes = [8, 128], strides = [1, 1]} : vector<64x128xf32> to vector<8x128xf32>
    %54 = arith.truncf %31 : vector<8x32xf32> to vector<8x32xbf16>
    %cst_19 = arith.constant dense<0.000000e+00> : vector<8x128xf32>
    %55 = tpu.matmul %54, %6, %cst_19 {dimension_numbers = #tpu.dot_dimension_numbers<[1], [0], [0], [1], [0, 0, 1, 1], [], []>} : vector<8x32xbf16>, vector<32x128xbf16>, vector<8x128xf32> -> vector<8x128xf32>
    %56 = arith.addf %53, %55 : vector<8x128xf32>
    %57 = arith.negf %56 : vector<8x128xf32>
    %58 = math.exp %57 : vector<8x128xf32>
    %cst_20 = arith.constant 1.000000e+00 : f32
    %59 = vector.broadcast %cst_20 : f32 to vector<8x128xf32>
    %60 = arith.addf %59, %58 : vector<8x128xf32>
    %61 = arith.divf %59, %60 : vector<8x128xf32>
    %62 = math.tanh %56 : vector<8x128xf32>
    %63 = vector.extract_strided_slice %61 {offsets = [0, 0], sizes = [8, 32], strides = [1, 1]} : vector<8x128xf32> to vector<8x32xf32>
    %64 = vector.extract_strided_slice %61 {offsets = [0, 32], sizes = [8, 32], strides = [1, 1]} : vector<8x128xf32> to vector<8x32xf32>
    %65 = vector.extract_strided_slice %62 {offsets = [0, 64], sizes = [8, 32], strides = [1, 1]} : vector<8x128xf32> to vector<8x32xf32>
    %66 = vector.extract_strided_slice %61 {offsets = [0, 96], sizes = [8, 32], strides = [1, 1]} : vector<8x128xf32> to vector<8x32xf32>
    %67 = arith.mulf %64, %29 : vector<8x32xf32>
    %68 = arith.mulf %63, %65 : vector<8x32xf32>
    %69 = arith.addf %67, %68 : vector<8x32xf32>
    %70 = math.tanh %69 : vector<8x32xf32>
    %71 = arith.mulf %66, %70 : vector<8x32xf32>
    %72 = arith.truncf %71 : vector<8x32xf32> to vector<8x32xbf16>
    %cst_21 = arith.constant dense<0.000000e+00> : vector<8x128xf32>
    %73 = tpu.matmul %72, %7, %cst_21 {dimension_numbers = #tpu.dot_dimension_numbers<[1], [0], [0], [1], [0, 0, 1, 1], [], []>} : vector<8x32xbf16>, vector<32x128xbf16>, vector<8x128xf32> -> vector<8x128xf32>
    %74 = arith.truncf %52 : vector<8x32xf32> to vector<8x32xbf16>
    %cst_22 = arith.constant dense<0.000000e+00> : vector<8x128xf32>
    %75 = tpu.matmul %74, %8, %cst_22 {dimension_numbers = #tpu.dot_dimension_numbers<[1], [0], [0], [1], [0, 0, 1, 1], [], []>} : vector<8x32xbf16>, vector<32x128xbf16>, vector<8x128xf32> -> vector<8x128xf32>
    %76 = arith.addf %73, %75 : vector<8x128xf32>
    %77 = arith.addf %76, %11 : vector<8x128xf32>
    %78 = arith.negf %77 : vector<8x128xf32>
    %79 = math.exp %78 : vector<8x128xf32>
    %cst_23 = arith.constant 1.000000e+00 : f32
    %80 = vector.broadcast %cst_23 : f32 to vector<8x128xf32>
    %81 = arith.addf %80, %79 : vector<8x128xf32>
    %82 = arith.divf %80, %81 : vector<8x128xf32>
    %83 = math.tanh %77 : vector<8x128xf32>
    %84 = vector.extract_strided_slice %82 {offsets = [0, 0], sizes = [8, 32], strides = [1, 1]} : vector<8x128xf32> to vector<8x32xf32>
    %85 = vector.extract_strided_slice %82 {offsets = [0, 32], sizes = [8, 32], strides = [1, 1]} : vector<8x128xf32> to vector<8x32xf32>
    %86 = vector.extract_strided_slice %83 {offsets = [0, 64], sizes = [8, 32], strides = [1, 1]} : vector<8x128xf32> to vector<8x32xf32>
    %87 = vector.extract_strided_slice %82 {offsets = [0, 96], sizes = [8, 32], strides = [1, 1]} : vector<8x128xf32> to vector<8x32xf32>
    %88 = arith.mulf %85, %50 : vector<8x32xf32>
    %89 = arith.mulf %84, %86 : vector<8x32xf32>
    %90 = arith.addf %88, %89 : vector<8x32xf32>
    %91 = math.tanh %90 : vector<8x32xf32>
    %92 = arith.mulf %87, %91 : vector<8x32xf32>
    %93 = vector.extract_strided_slice %5 {offsets = [16, 0], sizes = [8, 128], strides = [1, 1]} : vector<64x128xf32> to vector<8x128xf32>
    %94 = arith.truncf %71 : vector<8x32xf32> to vector<8x32xbf16>
    %cst_24 = arith.constant dense<0.000000e+00> : vector<8x128xf32>
    %95 = tpu.matmul %94, %6, %cst_24 {dimension_numbers = #tpu.dot_dimension_numbers<[1], [0], [0], [1], [0, 0, 1, 1], [], []>} : vector<8x32xbf16>, vector<32x128xbf16>, vector<8x128xf32> -> vector<8x128xf32>
    %96 = arith.addf %93, %95 : vector<8x128xf32>
    %97 = arith.negf %96 : vector<8x128xf32>
    %98 = math.exp %97 : vector<8x128xf32>
    %cst_25 = arith.constant 1.000000e+00 : f32
    %99 = vector.broadcast %cst_25 : f32 to vector<8x128xf32>
    %100 = arith.addf %99, %98 : vector<8x128xf32>
    %101 = arith.divf %99, %100 : vector<8x128xf32>
    %102 = math.tanh %96 : vector<8x128xf32>
    %103 = vector.extract_strided_slice %101 {offsets = [0, 0], sizes = [8, 32], strides = [1, 1]} : vector<8x128xf32> to vector<8x32xf32>
    %104 = vector.extract_strided_slice %101 {offsets = [0, 32], sizes = [8, 32], strides = [1, 1]} : vector<8x128xf32> to vector<8x32xf32>
    %105 = vector.extract_strided_slice %102 {offsets = [0, 64], sizes = [8, 32], strides = [1, 1]} : vector<8x128xf32> to vector<8x32xf32>
    %106 = vector.extract_strided_slice %101 {offsets = [0, 96], sizes = [8, 32], strides = [1, 1]} : vector<8x128xf32> to vector<8x32xf32>
    %107 = arith.mulf %104, %69 : vector<8x32xf32>
    %108 = arith.mulf %103, %105 : vector<8x32xf32>
    %109 = arith.addf %107, %108 : vector<8x32xf32>
    %110 = math.tanh %109 : vector<8x32xf32>
    %111 = arith.mulf %106, %110 : vector<8x32xf32>
    %112 = arith.truncf %111 : vector<8x32xf32> to vector<8x32xbf16>
    %cst_26 = arith.constant dense<0.000000e+00> : vector<8x128xf32>
    %113 = tpu.matmul %112, %7, %cst_26 {dimension_numbers = #tpu.dot_dimension_numbers<[1], [0], [0], [1], [0, 0, 1, 1], [], []>} : vector<8x32xbf16>, vector<32x128xbf16>, vector<8x128xf32> -> vector<8x128xf32>
    %114 = arith.truncf %92 : vector<8x32xf32> to vector<8x32xbf16>
    %cst_27 = arith.constant dense<0.000000e+00> : vector<8x128xf32>
    %115 = tpu.matmul %114, %8, %cst_27 {dimension_numbers = #tpu.dot_dimension_numbers<[1], [0], [0], [1], [0, 0, 1, 1], [], []>} : vector<8x32xbf16>, vector<32x128xbf16>, vector<8x128xf32> -> vector<8x128xf32>
    %116 = arith.addf %113, %115 : vector<8x128xf32>
    %117 = arith.addf %116, %11 : vector<8x128xf32>
    %118 = arith.negf %117 : vector<8x128xf32>
    %119 = math.exp %118 : vector<8x128xf32>
    %cst_28 = arith.constant 1.000000e+00 : f32
    %120 = vector.broadcast %cst_28 : f32 to vector<8x128xf32>
    %121 = arith.addf %120, %119 : vector<8x128xf32>
    %122 = arith.divf %120, %121 : vector<8x128xf32>
    %123 = math.tanh %117 : vector<8x128xf32>
    %124 = vector.extract_strided_slice %122 {offsets = [0, 0], sizes = [8, 32], strides = [1, 1]} : vector<8x128xf32> to vector<8x32xf32>
    %125 = vector.extract_strided_slice %122 {offsets = [0, 32], sizes = [8, 32], strides = [1, 1]} : vector<8x128xf32> to vector<8x32xf32>
    %126 = vector.extract_strided_slice %123 {offsets = [0, 64], sizes = [8, 32], strides = [1, 1]} : vector<8x128xf32> to vector<8x32xf32>
    %127 = vector.extract_strided_slice %122 {offsets = [0, 96], sizes = [8, 32], strides = [1, 1]} : vector<8x128xf32> to vector<8x32xf32>
    %128 = arith.mulf %125, %90 : vector<8x32xf32>
    %129 = arith.mulf %124, %126 : vector<8x32xf32>
    %130 = arith.addf %128, %129 : vector<8x32xf32>
    %131 = math.tanh %130 : vector<8x32xf32>
    %132 = arith.mulf %127, %131 : vector<8x32xf32>
    %133 = vector.extract_strided_slice %5 {offsets = [24, 0], sizes = [8, 128], strides = [1, 1]} : vector<64x128xf32> to vector<8x128xf32>
    %134 = arith.truncf %111 : vector<8x32xf32> to vector<8x32xbf16>
    %cst_29 = arith.constant dense<0.000000e+00> : vector<8x128xf32>
    %135 = tpu.matmul %134, %6, %cst_29 {dimension_numbers = #tpu.dot_dimension_numbers<[1], [0], [0], [1], [0, 0, 1, 1], [], []>} : vector<8x32xbf16>, vector<32x128xbf16>, vector<8x128xf32> -> vector<8x128xf32>
    %136 = arith.addf %133, %135 : vector<8x128xf32>
    %137 = arith.negf %136 : vector<8x128xf32>
    %138 = math.exp %137 : vector<8x128xf32>
    %cst_30 = arith.constant 1.000000e+00 : f32
    %139 = vector.broadcast %cst_30 : f32 to vector<8x128xf32>
    %140 = arith.addf %139, %138 : vector<8x128xf32>
    %141 = arith.divf %139, %140 : vector<8x128xf32>
    %142 = math.tanh %136 : vector<8x128xf32>
    %143 = vector.extract_strided_slice %141 {offsets = [0, 0], sizes = [8, 32], strides = [1, 1]} : vector<8x128xf32> to vector<8x32xf32>
    %144 = vector.extract_strided_slice %141 {offsets = [0, 32], sizes = [8, 32], strides = [1, 1]} : vector<8x128xf32> to vector<8x32xf32>
    %145 = vector.extract_strided_slice %142 {offsets = [0, 64], sizes = [8, 32], strides = [1, 1]} : vector<8x128xf32> to vector<8x32xf32>
    %146 = vector.extract_strided_slice %141 {offsets = [0, 96], sizes = [8, 32], strides = [1, 1]} : vector<8x128xf32> to vector<8x32xf32>
    %147 = arith.mulf %144, %109 : vector<8x32xf32>
    %148 = arith.mulf %143, %145 : vector<8x32xf32>
    %149 = arith.addf %147, %148 : vector<8x32xf32>
    %150 = math.tanh %149 : vector<8x32xf32>
    %151 = arith.mulf %146, %150 : vector<8x32xf32>
    %152 = arith.truncf %151 : vector<8x32xf32> to vector<8x32xbf16>
    %cst_31 = arith.constant dense<0.000000e+00> : vector<8x128xf32>
    %153 = tpu.matmul %152, %7, %cst_31 {dimension_numbers = #tpu.dot_dimension_numbers<[1], [0], [0], [1], [0, 0, 1, 1], [], []>} : vector<8x32xbf16>, vector<32x128xbf16>, vector<8x128xf32> -> vector<8x128xf32>
    %154 = arith.truncf %132 : vector<8x32xf32> to vector<8x32xbf16>
    %cst_32 = arith.constant dense<0.000000e+00> : vector<8x128xf32>
    %155 = tpu.matmul %154, %8, %cst_32 {dimension_numbers = #tpu.dot_dimension_numbers<[1], [0], [0], [1], [0, 0, 1, 1], [], []>} : vector<8x32xbf16>, vector<32x128xbf16>, vector<8x128xf32> -> vector<8x128xf32>
    %156 = arith.addf %153, %155 : vector<8x128xf32>
    %157 = arith.addf %156, %11 : vector<8x128xf32>
    %158 = arith.negf %157 : vector<8x128xf32>
    %159 = math.exp %158 : vector<8x128xf32>
    %cst_33 = arith.constant 1.000000e+00 : f32
    %160 = vector.broadcast %cst_33 : f32 to vector<8x128xf32>
    %161 = arith.addf %160, %159 : vector<8x128xf32>
    %162 = arith.divf %160, %161 : vector<8x128xf32>
    %163 = math.tanh %157 : vector<8x128xf32>
    %164 = vector.extract_strided_slice %162 {offsets = [0, 0], sizes = [8, 32], strides = [1, 1]} : vector<8x128xf32> to vector<8x32xf32>
    %165 = vector.extract_strided_slice %162 {offsets = [0, 32], sizes = [8, 32], strides = [1, 1]} : vector<8x128xf32> to vector<8x32xf32>
    %166 = vector.extract_strided_slice %163 {offsets = [0, 64], sizes = [8, 32], strides = [1, 1]} : vector<8x128xf32> to vector<8x32xf32>
    %167 = vector.extract_strided_slice %162 {offsets = [0, 96], sizes = [8, 32], strides = [1, 1]} : vector<8x128xf32> to vector<8x32xf32>
    %168 = arith.mulf %165, %130 : vector<8x32xf32>
    %169 = arith.mulf %164, %166 : vector<8x32xf32>
    %170 = arith.addf %168, %169 : vector<8x32xf32>
    %171 = math.tanh %170 : vector<8x32xf32>
    %172 = arith.mulf %167, %171 : vector<8x32xf32>
    %173 = vector.extract_strided_slice %5 {offsets = [32, 0], sizes = [8, 128], strides = [1, 1]} : vector<64x128xf32> to vector<8x128xf32>
    %174 = arith.truncf %151 : vector<8x32xf32> to vector<8x32xbf16>
    %cst_34 = arith.constant dense<0.000000e+00> : vector<8x128xf32>
    %175 = tpu.matmul %174, %6, %cst_34 {dimension_numbers = #tpu.dot_dimension_numbers<[1], [0], [0], [1], [0, 0, 1, 1], [], []>} : vector<8x32xbf16>, vector<32x128xbf16>, vector<8x128xf32> -> vector<8x128xf32>
    %176 = arith.addf %173, %175 : vector<8x128xf32>
    %177 = arith.negf %176 : vector<8x128xf32>
    %178 = math.exp %177 : vector<8x128xf32>
    %cst_35 = arith.constant 1.000000e+00 : f32
    %179 = vector.broadcast %cst_35 : f32 to vector<8x128xf32>
    %180 = arith.addf %179, %178 : vector<8x128xf32>
    %181 = arith.divf %179, %180 : vector<8x128xf32>
    %182 = math.tanh %176 : vector<8x128xf32>
    %183 = vector.extract_strided_slice %181 {offsets = [0, 0], sizes = [8, 32], strides = [1, 1]} : vector<8x128xf32> to vector<8x32xf32>
    %184 = vector.extract_strided_slice %181 {offsets = [0, 32], sizes = [8, 32], strides = [1, 1]} : vector<8x128xf32> to vector<8x32xf32>
    %185 = vector.extract_strided_slice %182 {offsets = [0, 64], sizes = [8, 32], strides = [1, 1]} : vector<8x128xf32> to vector<8x32xf32>
    %186 = vector.extract_strided_slice %181 {offsets = [0, 96], sizes = [8, 32], strides = [1, 1]} : vector<8x128xf32> to vector<8x32xf32>
    %187 = arith.mulf %184, %149 : vector<8x32xf32>
    %188 = arith.mulf %183, %185 : vector<8x32xf32>
    %189 = arith.addf %187, %188 : vector<8x32xf32>
    %190 = math.tanh %189 : vector<8x32xf32>
    %191 = arith.mulf %186, %190 : vector<8x32xf32>
    %192 = arith.truncf %191 : vector<8x32xf32> to vector<8x32xbf16>
    %cst_36 = arith.constant dense<0.000000e+00> : vector<8x128xf32>
    %193 = tpu.matmul %192, %7, %cst_36 {dimension_numbers = #tpu.dot_dimension_numbers<[1], [0], [0], [1], [0, 0, 1, 1], [], []>} : vector<8x32xbf16>, vector<32x128xbf16>, vector<8x128xf32> -> vector<8x128xf32>
    %194 = arith.truncf %172 : vector<8x32xf32> to vector<8x32xbf16>
    %cst_37 = arith.constant dense<0.000000e+00> : vector<8x128xf32>
    %195 = tpu.matmul %194, %8, %cst_37 {dimension_numbers = #tpu.dot_dimension_numbers<[1], [0], [0], [1], [0, 0, 1, 1], [], []>} : vector<8x32xbf16>, vector<32x128xbf16>, vector<8x128xf32> -> vector<8x128xf32>
    %196 = arith.addf %193, %195 : vector<8x128xf32>
    %197 = arith.addf %196, %11 : vector<8x128xf32>
    %198 = arith.negf %197 : vector<8x128xf32>
    %199 = math.exp %198 : vector<8x128xf32>
    %cst_38 = arith.constant 1.000000e+00 : f32
    %200 = vector.broadcast %cst_38 : f32 to vector<8x128xf32>
    %201 = arith.addf %200, %199 : vector<8x128xf32>
    %202 = arith.divf %200, %201 : vector<8x128xf32>
    %203 = math.tanh %197 : vector<8x128xf32>
    %204 = vector.extract_strided_slice %202 {offsets = [0, 0], sizes = [8, 32], strides = [1, 1]} : vector<8x128xf32> to vector<8x32xf32>
    %205 = vector.extract_strided_slice %202 {offsets = [0, 32], sizes = [8, 32], strides = [1, 1]} : vector<8x128xf32> to vector<8x32xf32>
    %206 = vector.extract_strided_slice %203 {offsets = [0, 64], sizes = [8, 32], strides = [1, 1]} : vector<8x128xf32> to vector<8x32xf32>
    %207 = vector.extract_strided_slice %202 {offsets = [0, 96], sizes = [8, 32], strides = [1, 1]} : vector<8x128xf32> to vector<8x32xf32>
    %208 = arith.mulf %205, %170 : vector<8x32xf32>
    %209 = arith.mulf %204, %206 : vector<8x32xf32>
    %210 = arith.addf %208, %209 : vector<8x32xf32>
    %211 = math.tanh %210 : vector<8x32xf32>
    %212 = arith.mulf %207, %211 : vector<8x32xf32>
    %213 = vector.extract_strided_slice %5 {offsets = [40, 0], sizes = [8, 128], strides = [1, 1]} : vector<64x128xf32> to vector<8x128xf32>
    %214 = arith.truncf %191 : vector<8x32xf32> to vector<8x32xbf16>
    %cst_39 = arith.constant dense<0.000000e+00> : vector<8x128xf32>
    %215 = tpu.matmul %214, %6, %cst_39 {dimension_numbers = #tpu.dot_dimension_numbers<[1], [0], [0], [1], [0, 0, 1, 1], [], []>} : vector<8x32xbf16>, vector<32x128xbf16>, vector<8x128xf32> -> vector<8x128xf32>
    %216 = arith.addf %213, %215 : vector<8x128xf32>
    %217 = arith.negf %216 : vector<8x128xf32>
    %218 = math.exp %217 : vector<8x128xf32>
    %cst_40 = arith.constant 1.000000e+00 : f32
    %219 = vector.broadcast %cst_40 : f32 to vector<8x128xf32>
    %220 = arith.addf %219, %218 : vector<8x128xf32>
    %221 = arith.divf %219, %220 : vector<8x128xf32>
    %222 = math.tanh %216 : vector<8x128xf32>
    %223 = vector.extract_strided_slice %221 {offsets = [0, 0], sizes = [8, 32], strides = [1, 1]} : vector<8x128xf32> to vector<8x32xf32>
    %224 = vector.extract_strided_slice %221 {offsets = [0, 32], sizes = [8, 32], strides = [1, 1]} : vector<8x128xf32> to vector<8x32xf32>
    %225 = vector.extract_strided_slice %222 {offsets = [0, 64], sizes = [8, 32], strides = [1, 1]} : vector<8x128xf32> to vector<8x32xf32>
    %226 = vector.extract_strided_slice %221 {offsets = [0, 96], sizes = [8, 32], strides = [1, 1]} : vector<8x128xf32> to vector<8x32xf32>
    %227 = arith.mulf %224, %189 : vector<8x32xf32>
    %228 = arith.mulf %223, %225 : vector<8x32xf32>
    %229 = arith.addf %227, %228 : vector<8x32xf32>
    %230 = math.tanh %229 : vector<8x32xf32>
    %231 = arith.mulf %226, %230 : vector<8x32xf32>
    %232 = arith.truncf %231 : vector<8x32xf32> to vector<8x32xbf16>
    %cst_41 = arith.constant dense<0.000000e+00> : vector<8x128xf32>
    %233 = tpu.matmul %232, %7, %cst_41 {dimension_numbers = #tpu.dot_dimension_numbers<[1], [0], [0], [1], [0, 0, 1, 1], [], []>} : vector<8x32xbf16>, vector<32x128xbf16>, vector<8x128xf32> -> vector<8x128xf32>
    %234 = arith.truncf %212 : vector<8x32xf32> to vector<8x32xbf16>
    %cst_42 = arith.constant dense<0.000000e+00> : vector<8x128xf32>
    %235 = tpu.matmul %234, %8, %cst_42 {dimension_numbers = #tpu.dot_dimension_numbers<[1], [0], [0], [1], [0, 0, 1, 1], [], []>} : vector<8x32xbf16>, vector<32x128xbf16>, vector<8x128xf32> -> vector<8x128xf32>
    %236 = arith.addf %233, %235 : vector<8x128xf32>
    %237 = arith.addf %236, %11 : vector<8x128xf32>
    %238 = arith.negf %237 : vector<8x128xf32>
    %239 = math.exp %238 : vector<8x128xf32>
    %cst_43 = arith.constant 1.000000e+00 : f32
    %240 = vector.broadcast %cst_43 : f32 to vector<8x128xf32>
    %241 = arith.addf %240, %239 : vector<8x128xf32>
    %242 = arith.divf %240, %241 : vector<8x128xf32>
    %243 = math.tanh %237 : vector<8x128xf32>
    %244 = vector.extract_strided_slice %242 {offsets = [0, 0], sizes = [8, 32], strides = [1, 1]} : vector<8x128xf32> to vector<8x32xf32>
    %245 = vector.extract_strided_slice %242 {offsets = [0, 32], sizes = [8, 32], strides = [1, 1]} : vector<8x128xf32> to vector<8x32xf32>
    %246 = vector.extract_strided_slice %243 {offsets = [0, 64], sizes = [8, 32], strides = [1, 1]} : vector<8x128xf32> to vector<8x32xf32>
    %247 = vector.extract_strided_slice %242 {offsets = [0, 96], sizes = [8, 32], strides = [1, 1]} : vector<8x128xf32> to vector<8x32xf32>
    %248 = arith.mulf %245, %210 : vector<8x32xf32>
    %249 = arith.mulf %244, %246 : vector<8x32xf32>
    %250 = arith.addf %248, %249 : vector<8x32xf32>
    %251 = math.tanh %250 : vector<8x32xf32>
    %252 = arith.mulf %247, %251 : vector<8x32xf32>
    %253 = vector.extract_strided_slice %5 {offsets = [48, 0], sizes = [8, 128], strides = [1, 1]} : vector<64x128xf32> to vector<8x128xf32>
    %254 = arith.truncf %231 : vector<8x32xf32> to vector<8x32xbf16>
    %cst_44 = arith.constant dense<0.000000e+00> : vector<8x128xf32>
    %255 = tpu.matmul %254, %6, %cst_44 {dimension_numbers = #tpu.dot_dimension_numbers<[1], [0], [0], [1], [0, 0, 1, 1], [], []>} : vector<8x32xbf16>, vector<32x128xbf16>, vector<8x128xf32> -> vector<8x128xf32>
    %256 = arith.addf %253, %255 : vector<8x128xf32>
    %257 = arith.negf %256 : vector<8x128xf32>
    %258 = math.exp %257 : vector<8x128xf32>
    %cst_45 = arith.constant 1.000000e+00 : f32
    %259 = vector.broadcast %cst_45 : f32 to vector<8x128xf32>
    %260 = arith.addf %259, %258 : vector<8x128xf32>
    %261 = arith.divf %259, %260 : vector<8x128xf32>
    %262 = math.tanh %256 : vector<8x128xf32>
    %263 = vector.extract_strided_slice %261 {offsets = [0, 0], sizes = [8, 32], strides = [1, 1]} : vector<8x128xf32> to vector<8x32xf32>
    %264 = vector.extract_strided_slice %261 {offsets = [0, 32], sizes = [8, 32], strides = [1, 1]} : vector<8x128xf32> to vector<8x32xf32>
    %265 = vector.extract_strided_slice %262 {offsets = [0, 64], sizes = [8, 32], strides = [1, 1]} : vector<8x128xf32> to vector<8x32xf32>
    %266 = vector.extract_strided_slice %261 {offsets = [0, 96], sizes = [8, 32], strides = [1, 1]} : vector<8x128xf32> to vector<8x32xf32>
    %267 = arith.mulf %264, %229 : vector<8x32xf32>
    %268 = arith.mulf %263, %265 : vector<8x32xf32>
    %269 = arith.addf %267, %268 : vector<8x32xf32>
    %270 = math.tanh %269 : vector<8x32xf32>
    %271 = arith.mulf %266, %270 : vector<8x32xf32>
    %272 = arith.truncf %271 : vector<8x32xf32> to vector<8x32xbf16>
    %cst_46 = arith.constant dense<0.000000e+00> : vector<8x128xf32>
    %273 = tpu.matmul %272, %7, %cst_46 {dimension_numbers = #tpu.dot_dimension_numbers<[1], [0], [0], [1], [0, 0, 1, 1], [], []>} : vector<8x32xbf16>, vector<32x128xbf16>, vector<8x128xf32> -> vector<8x128xf32>
    %274 = arith.truncf %252 : vector<8x32xf32> to vector<8x32xbf16>
    %cst_47 = arith.constant dense<0.000000e+00> : vector<8x128xf32>
    %275 = tpu.matmul %274, %8, %cst_47 {dimension_numbers = #tpu.dot_dimension_numbers<[1], [0], [0], [1], [0, 0, 1, 1], [], []>} : vector<8x32xbf16>, vector<32x128xbf16>, vector<8x128xf32> -> vector<8x128xf32>
    %276 = arith.addf %273, %275 : vector<8x128xf32>
    %277 = arith.addf %276, %11 : vector<8x128xf32>
    %278 = arith.negf %277 : vector<8x128xf32>
    %279 = math.exp %278 : vector<8x128xf32>
    %cst_48 = arith.constant 1.000000e+00 : f32
    %280 = vector.broadcast %cst_48 : f32 to vector<8x128xf32>
    %281 = arith.addf %280, %279 : vector<8x128xf32>
    %282 = arith.divf %280, %281 : vector<8x128xf32>
    %283 = math.tanh %277 : vector<8x128xf32>
    %284 = vector.extract_strided_slice %282 {offsets = [0, 0], sizes = [8, 32], strides = [1, 1]} : vector<8x128xf32> to vector<8x32xf32>
    %285 = vector.extract_strided_slice %282 {offsets = [0, 32], sizes = [8, 32], strides = [1, 1]} : vector<8x128xf32> to vector<8x32xf32>
    %286 = vector.extract_strided_slice %283 {offsets = [0, 64], sizes = [8, 32], strides = [1, 1]} : vector<8x128xf32> to vector<8x32xf32>
    %287 = vector.extract_strided_slice %282 {offsets = [0, 96], sizes = [8, 32], strides = [1, 1]} : vector<8x128xf32> to vector<8x32xf32>
    %288 = arith.mulf %285, %250 : vector<8x32xf32>
    %289 = arith.mulf %284, %286 : vector<8x32xf32>
    %290 = arith.addf %288, %289 : vector<8x32xf32>
    %291 = math.tanh %290 : vector<8x32xf32>
    %292 = arith.mulf %287, %291 : vector<8x32xf32>
    %293 = vector.extract_strided_slice %5 {offsets = [56, 0], sizes = [8, 128], strides = [1, 1]} : vector<64x128xf32> to vector<8x128xf32>
    %294 = arith.truncf %271 : vector<8x32xf32> to vector<8x32xbf16>
    %cst_49 = arith.constant dense<0.000000e+00> : vector<8x128xf32>
    %295 = tpu.matmul %294, %6, %cst_49 {dimension_numbers = #tpu.dot_dimension_numbers<[1], [0], [0], [1], [0, 0, 1, 1], [], []>} : vector<8x32xbf16>, vector<32x128xbf16>, vector<8x128xf32> -> vector<8x128xf32>
    %296 = arith.addf %293, %295 : vector<8x128xf32>
    %297 = arith.negf %296 : vector<8x128xf32>
    %298 = math.exp %297 : vector<8x128xf32>
    %cst_50 = arith.constant 1.000000e+00 : f32
    %299 = vector.broadcast %cst_50 : f32 to vector<8x128xf32>
    %300 = arith.addf %299, %298 : vector<8x128xf32>
    %301 = arith.divf %299, %300 : vector<8x128xf32>
    %302 = math.tanh %296 : vector<8x128xf32>
    %303 = vector.extract_strided_slice %301 {offsets = [0, 0], sizes = [8, 32], strides = [1, 1]} : vector<8x128xf32> to vector<8x32xf32>
    %304 = vector.extract_strided_slice %301 {offsets = [0, 32], sizes = [8, 32], strides = [1, 1]} : vector<8x128xf32> to vector<8x32xf32>
    %305 = vector.extract_strided_slice %302 {offsets = [0, 64], sizes = [8, 32], strides = [1, 1]} : vector<8x128xf32> to vector<8x32xf32>
    %306 = vector.extract_strided_slice %301 {offsets = [0, 96], sizes = [8, 32], strides = [1, 1]} : vector<8x128xf32> to vector<8x32xf32>
    %307 = arith.mulf %304, %269 : vector<8x32xf32>
    %308 = arith.mulf %303, %305 : vector<8x32xf32>
    %309 = arith.addf %307, %308 : vector<8x32xf32>
    %310 = math.tanh %309 : vector<8x32xf32>
    %311 = arith.mulf %306, %310 : vector<8x32xf32>
    %312 = arith.truncf %311 : vector<8x32xf32> to vector<8x32xbf16>
    %cst_51 = arith.constant dense<0.000000e+00> : vector<8x128xf32>
    %313 = tpu.matmul %312, %7, %cst_51 {dimension_numbers = #tpu.dot_dimension_numbers<[1], [0], [0], [1], [0, 0, 1, 1], [], []>} : vector<8x32xbf16>, vector<32x128xbf16>, vector<8x128xf32> -> vector<8x128xf32>
    %314 = arith.truncf %292 : vector<8x32xf32> to vector<8x32xbf16>
    %cst_52 = arith.constant dense<0.000000e+00> : vector<8x128xf32>
    %315 = tpu.matmul %314, %8, %cst_52 {dimension_numbers = #tpu.dot_dimension_numbers<[1], [0], [0], [1], [0, 0, 1, 1], [], []>} : vector<8x32xbf16>, vector<32x128xbf16>, vector<8x128xf32> -> vector<8x128xf32>
    %316 = arith.addf %313, %315 : vector<8x128xf32>
    %317 = arith.addf %316, %11 : vector<8x128xf32>
    %318 = arith.negf %317 : vector<8x128xf32>
    %319 = math.exp %318 : vector<8x128xf32>
    %cst_53 = arith.constant 1.000000e+00 : f32
    %320 = vector.broadcast %cst_53 : f32 to vector<8x128xf32>
    %321 = arith.addf %320, %319 : vector<8x128xf32>
    %322 = arith.divf %320, %321 : vector<8x128xf32>
    %323 = math.tanh %317 : vector<8x128xf32>
    %324 = vector.extract_strided_slice %322 {offsets = [0, 0], sizes = [8, 32], strides = [1, 1]} : vector<8x128xf32> to vector<8x32xf32>
    %325 = vector.extract_strided_slice %322 {offsets = [0, 32], sizes = [8, 32], strides = [1, 1]} : vector<8x128xf32> to vector<8x32xf32>
    %326 = vector.extract_strided_slice %323 {offsets = [0, 64], sizes = [8, 32], strides = [1, 1]} : vector<8x128xf32> to vector<8x32xf32>
    %327 = vector.extract_strided_slice %322 {offsets = [0, 96], sizes = [8, 32], strides = [1, 1]} : vector<8x128xf32> to vector<8x32xf32>
    %328 = arith.mulf %325, %290 : vector<8x32xf32>
    %329 = arith.mulf %324, %326 : vector<8x32xf32>
    %330 = arith.addf %328, %329 : vector<8x32xf32>
    %331 = math.tanh %330 : vector<8x32xf32>
    %332 = arith.mulf %327, %331 : vector<8x32xf32>
    %333 = tpu.concatenate %52, %92, %132, %172, %212, %252, %292, %332 in 0 : vector<8x32xf32>, vector<8x32xf32>, vector<8x32xf32>, vector<8x32xf32>, vector<8x32xf32>, vector<8x32xf32>, vector<8x32xf32>, vector<8x32xf32> -> vector<64x32xf32>
    %334 = arith.truncf %333 : vector<64x32xf32> to vector<64x32xbf16>
    %c0_54 = arith.constant 0 : index
    %c0_55 = arith.constant 0 : index
    %335 = vector.load %arg7[%c0_54, %c0_55] : memref<32x128xbf16, #tpu.memory_space<vmem>>, vector<32x128xbf16>
    %cst_56 = arith.constant dense<0.000000e+00> : vector<64x128xf32>
    %336 = tpu.matmul %334, %335, %cst_56 {dimension_numbers = #tpu.dot_dimension_numbers<[1], [0], [0], [1], [0, 0, 1, 1], [], []>} : vector<64x32xbf16>, vector<32x128xbf16>, vector<64x128xf32> -> vector<64x128xf32>
    %c0_57 = arith.constant 0 : index
    %c0_58 = arith.constant 0 : index
    %337 = vector.load %arg8[%c0_57, %c0_58] : memref<1x128xf32, #tpu.memory_space<vmem>>, vector<1x128xf32>
    %338 = vector.broadcast %337 : vector<1x128xf32> to vector<64x128xf32>
    %339 = arith.addf %336, %338 : vector<64x128xf32>
    %c0_59 = arith.constant 0 : index
    %c0_60 = arith.constant 0 : index
    %340 = vector.load %arg9[%c0_59, %c0_60] : memref<64x128xf32, #tpu.memory_space<vmem>>, vector<64x128xf32>
    tpu.vector_store %arg9[%c0_59, %c0_60], %339 {strides = array<i32>} : memref<64x128xf32, #tpu.memory_space<vmem>>, vector<64x128xf32>,
    return
  }
}

</mosaic_0001>

<llo_original>
// kernel: lstm_reg_forward.1
$region0: #{lstm_reg_forward.1}
  #allocation0 [shape = 'u32[]', space=smem, size = 0x4, offset = 0x4, fixed_abs, tag = 'smem constant byte address 0x4 - core index']
  #allocation1 [shape = 'u32[144,128]{1,0:T(1,128)}', space=vmem, size = 0x12000, scoped, tag = 'internal scratch']
  %s0 = inlined_call_operand.vmem [shape: bf16[64,4], index: 0, kind: input, shape index: {}]
  %s1 = inlined_call_operand.vmem [shape: bf16[4,128], index: 1, kind: input, shape index: {}]
  %s2 = inlined_call_operand.vmem [shape: bf16[32,128], index: 2, kind: input, shape index: {}]
  %s3 = inlined_call_operand.vmem [shape: f32[1,128], index: 3, kind: input, shape index: {}]
  %s4 = inlined_call_operand.vmem [shape: bf16[32,128], index: 4, kind: input, shape index: {}]
  %s5 = inlined_call_operand.vmem [shape: bf16[32,128], index: 5, kind: input, shape index: {}]
  %s6 = inlined_call_operand.vmem [shape: f32[1,128], index: 6, kind: input, shape index: {}]
  %s7 = inlined_call_operand.vmem [shape: bf16[32,128], index: 7, kind: input, shape index: {}]
  %s8 = inlined_call_operand.vmem [shape: f32[1,128], index: 8, kind: input, shape index: {}]
  %s9 = inlined_call_operand.vmem [shape: f32[64,128], index: 9, kind: output, shape index: {}]
  %s10 = sld [smem:[#allocation0]]
  $region46: #{lstm_reg_forward.1} parent=0
    _
  %s12 = ssub.s32 1, %s10
  %s13 = scalar_select 0, %s12, %s10
  // Predicated region
  $region2: #{lstm_reg_forward.1} parent=0 // pred_check
    _
  $region3: #{lstm_reg_forward.1} parent=0 // pred_check_branch
    %15 = sbr.rel (0) target = $region5
  $region4: #{lstm_reg_forward.1} parent=0 // pred_region
    _
  $region5: #{lstm_reg_forward.1} parent=0 // pred_fallthru
    _
  // Predicated region
  $region6: #{lstm_reg_forward.1} parent=0 // pred_check
    _
  $region7: #{lstm_reg_forward.1} parent=0 // pred_check_branch
    %17 = sbr.rel (0) target = $region9
  $region8: #{lstm_reg_forward.1} parent=0 // pred_region
    _
  $region9: #{lstm_reg_forward.1} parent=0 // pred_fallthru
    _
  // Predicated region
  $region10: #{lstm_reg_forward.1} parent=0 // pred_check
    _
  $region11: #{lstm_reg_forward.1} parent=0 // pred_check_branch
    %19 = sbr.rel (0) target = $region13
  $region12: #{lstm_reg_forward.1} parent=0 // pred_region
    _
  $region13: #{lstm_reg_forward.1} parent=0 // pred_fallthru
    _
  // Predicated region
  $region14: #{lstm_reg_forward.1} parent=0 // pred_check
    _
  $region15: #{lstm_reg_forward.1} parent=0 // pred_check_branch
    %21 = sbr.rel (0) target = $region17
  $region16: #{lstm_reg_forward.1} parent=0 // pred_region
    _
  $region17: #{lstm_reg_forward.1} parent=0 // pred_fallthru
    _
  // Predicated region
  $region18: #{lstm_reg_forward.1} parent=0 // pred_check
    _
  $region19: #{lstm_reg_forward.1} parent=0 // pred_check_branch
    %23 = sbr.rel (0) target = $region21
  $region20: #{lstm_reg_forward.1} parent=0 // pred_region
    _
  $region21: #{lstm_reg_forward.1} parent=0 // pred_fallthru
    _
  // Predicated region
  $region22: #{lstm_reg_forward.1} parent=0 // pred_check
    _
  $region23: #{lstm_reg_forward.1} parent=0 // pred_check_branch
    %25 = sbr.rel (0) target = $region25
  $region24: #{lstm_reg_forward.1} parent=0 // pred_region
    _
  $region25: #{lstm_reg_forward.1} parent=0 // pred_fallthru
    _
  // Predicated region
  $region26: #{lstm_reg_forward.1} parent=0 // pred_check
    _
  $region27: #{lstm_reg_forward.1} parent=0 // pred_check_branch
    %27 = sbr.rel (0) target = $region29
  $region28: #{lstm_reg_forward.1} parent=0 // pred_region
    _
  $region29: #{lstm_reg_forward.1} parent=0 // pred_fallthru
    _
  // Predicated region
  $region30: #{lstm_reg_forward.1} parent=0 // pred_check
    _
  $region31: #{lstm_reg_forward.1} parent=0 // pred_check_branch
    %29 = sbr.rel (0) target = $region33
  $region32: #{lstm_reg_forward.1} parent=0 // pred_region
    _
  $region33: #{lstm_reg_forward.1} parent=0 // pred_fallthru
    _
  // Predicated region
  $region34: #{lstm_reg_forward.1} parent=0 // pred_check
    _
  $region35: #{lstm_reg_forward.1} parent=0 // pred_check_branch
    %31 = sbr.rel (0) target = $region37
  $region36: #{lstm_reg_forward.1} parent=0 // pred_region
    _
  $region37: #{lstm_reg_forward.1} parent=0 // pred_fallthru
    _
  %v33 = vld [vmem:[%s0] sm:$0xf]
  %v34 = vld [vmem:[%s0 + $0x4] sm:$0xf]
  %v35 = vld [vmem:[%s0 + $0x8] sm:$0xf]
  %v36 = vld [vmem:[%s0 + $0xc] sm:$0xf]
  %v37 = vld [vmem:[%s0 + $0x10] sm:$0xf]
  %v38 = vld [vmem:[%s0 + $0x14] sm:$0xf]
  %v39 = vld [vmem:[%s0 + $0x18] sm:$0xf]
  %v40 = vld [vmem:[%s0 + $0x1c] sm:$0xf]
  %v41 = vld [vmem:[%s1] sm:$0x3]
  %v42 = vld [vmem:[%s3] sm:$0x1]
  %v44 = vlaneseq
  %v45 = vshrl.u32 %v44, 7
  %v46 = vsub.s32 0, %v45
  %v47 = vrot.slane %v42, %v46
  %v57 = vunpack.c.l.b16 %v33
  %v58 = vunpack.c.l.b16 %v34
  %v59 = vunpack.c.l.b16 %v35
  %v60 = vunpack.c.l.b16 %v36
  %v61 = vunpack.c.l.b16 %v37
  %v62 = vunpack.c.l.b16 %v38
  %v63 = vunpack.c.l.b16 %v39
  %v64 = vunpack.c.l.b16 %v40
  %v65 = vpack.c.b16 %v58, %v57
  %v66 = vpack.c.b16 %v60, %v59
  %v67 = vpack.c.b16 %v62, %v61
  %v68 = vpack.c.b16 %v64, %v63
  %vm69 = vcmask 31744
  %v71 = vsel %vm69, %v65, 0
  %v74 = vsel %vm69, %v66, 0
  %v77 = vsel %vm69, %v67, 0
  %v80 = vsel %vm69, %v68, 0
  %vm82 = vcmask 1041408
  %v84 = vsel %vm82, %v41, 0
  %86 = vmatprep.subr.bf16.mxu0 0
  %87 = vmatpush1.bf16.msra.mxu0 0
  %88 = vmatprep.subr.bf16.mxu0 0
  %89 = vmatpush1.bf16.msra.mxu0 0
  %90 = vmatprep.subr.bf16.mxu0 0
  %91 = vmatpush1.bf16.msra.mxu0 0
  %92 = vmatprep.subr.bf16.mxu0 0
  %93 = vmatpush1.bf16.msra.mxu0 0
  %94 = vmatprep.subr.bf16.mxu0 0
  %95 = vmatpush1.bf16.msra.mxu0 0
  %96 = vmatprep.subr.bf16.mxu0 0
  %97 = vmatpush1.bf16.msra.mxu0 0
  %98 = vmatprep.subr.bf16.mxu0 0
  %99 = vmatpush1.bf16.msra.mxu0 0
  %100 = vmatprep.subr.bf16.mxu0 0
  %101 = vmatpush1.bf16.msra.mxu0 %v84
  %102 = vmatprep.subr.bf16.mxu0 0
  %103 = vmatpush2.bf16.msra.mxu0 0
  %104 = vmatprep.subr.bf16.mxu0 0
  %105 = vmatpush2.bf16.msra.mxu0 0
  %106 = vmatprep.subr.bf16.mxu0 0
  %107 = vmatpush2.bf16.msra.mxu0 0
  %108 = vmatprep.subr.bf16.mxu0 0
  %109 = vmatpush2.bf16.msra.mxu0 0
  %110 = vmatprep.subr.bf16.mxu0 0
  %111 = vmatpush2.bf16.msra.mxu0 0
  %112 = vmatprep.subr.bf16.mxu0 0
  %113 = vmatpush2.bf16.msra.mxu0 0
  %114 = vmatprep.subr.bf16.mxu0 0
  %115 = vmatpush2.bf16.msra.mxu0 0
  %116 = vmatprep.subr.bf16.mxu0 0
  %117 = vmatpush2.bf16.msra.mxu0 0
  %118 = vmatprep.mubr.bf16.mxu0 0
  %119 = vmatmul.mubr.bf16.gmra.mxu0 %v71
  %v120 = vpop.f32.mrf.mxu0
  %v121 = vadd.f32 %v47, %v120
  %v122 = vpop.f32.mrf.mxu0
  %v123 = vpop.f32.mrf.mxu0
  %v124 = vadd.f32 %v47, %v123
  %v125 = vpop.f32.mrf.mxu0
  %126 = vmatprep.mubr.bf16.mxu0 0
  %127 = vmatmul.mubr.bf16.gmra.mxu0 %v74
  %v128 = vpop.f32.mrf.mxu0
  %v129 = vadd.f32 %v47, %v128
  %v130 = vpop.f32.mrf.mxu0
  %v131 = vpop.f32.mrf.mxu0
  %v132 = vadd.f32 %v47, %v131
  %v133 = vpop.f32.mrf.mxu0
  %134 = vmatprep.mubr.bf16.mxu0 0
  %135 = vmatmul.mubr.bf16.gmra.mxu0 %v77
  %v136 = vpop.f32.mrf.mxu0
  %v137 = vadd.f32 %v47, %v136
  %v138 = vpop.f32.mrf.mxu0
  %v139 = vpop.f32.mrf.mxu0
  %v140 = vadd.f32 %v47, %v139
  %v141 = vpop.f32.mrf.mxu0
  %142 = vmatprep.mubr.bf16.mxu0 0
  %143 = vmatmul.mubr.bf16.gmra.mxu0 %v80
  %v144 = vpop.f32.mrf.mxu0
  %v145 = vadd.f32 %v47, %v144
  %v146 = vpop.f32.mrf.mxu0
  %v147 = vpop.f32.mrf.mxu0
  %v148 = vadd.f32 %v47, %v147
  %v149 = vpop.f32.mrf.mxu0
  %150 = vdwg.mxu0
  %v151 = vld [vmem:[%s2] sm:$0xf]
  %v152 = vld [vmem:[%s2 + $0x4] sm:$0xf]
  %v153 = vld [vmem:[%s2 + $0x8] sm:$0xf]
  %v154 = vld [vmem:[%s2 + $0xc] sm:$0xf]
  %v155 = vld [vmem:[%s4] sm:$0xf]
  %v156 = vld [vmem:[%s4 + $0x4] sm:$0xf]
  %v157 = vld [vmem:[%s4 + $0x8] sm:$0xf]
  %v158 = vld [vmem:[%s4 + $0xc] sm:$0xf]
  %v159 = vld [vmem:[%s5] sm:$0xf]
  %v160 = vld [vmem:[%s5 + $0x4] sm:$0xf]
  %v161 = vld [vmem:[%s5 + $0x8] sm:$0xf]
  %v162 = vld [vmem:[%s5 + $0xc] sm:$0xf]
  %v163 = vld [vmem:[%s6] sm:$0x1]
  %v165 = vlaneseq
  %v166 = vshrl.u32 %v165, 7
  %v167 = vsub.s32 0, %v166
  %v168 = vrot.slane %v163, %v167
  %v174 = vunpack.c.l.b16 %v151
  %v175 = vunpack.c.l.b16 %v152
  %v176 = vunpack.c.l.b16 %v153
  %v177 = vunpack.c.l.b16 %v154
  %v178 = vpack.c.b16 %v175, %v174
  %v179 = vpack.c.b16 %v177, %v176
  %vm182 = vcmask 261120
  %v184 = vsel %vm182, 0, 0
  %186 = vmatprep.subr.bf16.mxu0 0
  %187 = vmatpush1.bf16.msra.mxu0 0
  %188 = vmatprep.subr.bf16.mxu0 0
  %189 = vmatpush1.bf16.msra.mxu0 0
  %190 = vmatprep.subr.bf16.mxu0 0
  %191 = vmatpush1.bf16.msra.mxu0 0
  %192 = vmatprep.subr.bf16.mxu0 0
  %193 = vmatpush1.bf16.msra.mxu0 0
  %194 = vmatprep.subr.bf16.mxu0 0
  %195 = vmatpush1.bf16.msra.mxu0 0
  %196 = vmatprep.subr.bf16.mxu0 0
  %197 = vmatpush1.bf16.msra.mxu0 0
  %198 = vmatprep.subr.bf16.mxu0 0
  %199 = vmatpush1.bf16.msra.mxu0 %v179
  %200 = vmatprep.subr.bf16.mxu0 0
  %201 = vmatpush1.bf16.msra.mxu0 %v178
  %202 = vmatprep.subr.bf16.mxu0 0
  %203 = vmatpush2.bf16.msra.mxu0 0
  %204 = vmatprep.subr.bf16.mxu0 0
  %205 = vmatpush2.bf16.msra.mxu0 0
  %206 = vmatprep.subr.bf16.mxu0 0
  %207 = vmatpush2.bf16.msra.mxu0 0
  %208 = vmatprep.subr.bf16.mxu0 0
  %209 = vmatpush2.bf16.msra.mxu0 0
  %210 = vmatprep.subr.bf16.mxu0 0
  %211 = vmatpush2.bf16.msra.mxu0 0
  %212 = vmatprep.subr.bf16.mxu0 0
  %213 = vmatpush2.bf16.msra.mxu0 0
  %214 = vmatprep.subr.bf16.mxu0 0
  %215 = vmatpush2.bf16.msra.mxu0 0
  %216 = vmatprep.subr.bf16.mxu0 0
  %217 = vmatpush2.bf16.msra.mxu0 0
  %218 = vmatprep.mubr.bf16.mxu0 0
  %219 = vmatmul.mubr.bf16.gmra.mxu0 %v184
  %v220 = vpop.f32.mrf.mxu0
  %v221 = vadd.f32 0.0, %v220
  %v222 = vpop.f32.mrf.mxu0
  %v223 = vpop.f32.mrf.mxu0
  %v224 = vpop.f32.mrf.mxu0
  %225 = vdwg.mxu0
  %v226 = vadd.f32 %v121, %v221
  %v227 = vxor.u32 %v226, 2147483648
  %v228 = vmul.f32 %v227, 1.442695
  %v229 = vpow.pop %v228
  %v230 = vadd.f32 %v229, 1.0
  %v231 = vrcp.pop %v230
  %v232 = vmul.f32 1.0, %v231
  %v233 = vtanh.pop %v226
  %v234 = vmul.f32 %v232, 0.0
  %236 = vrot.lane.b32.xlu0 %v233, 64
  %v237 = vpop.permute.xlu0 %236
  %v239 = vmul.f32 %v232, %v237
  %241 = vrot.lane.b32.xlu0 %v239, 32
  %v242 = vpop.permute.xlu0 %241
  %v244 = vadd.f32 %v234, %v242
  %v245 = vtanh.pop %v244
  %247 = vrot.lane.b32.xlu0 %v245, 64
  %v248 = vpop.permute.xlu0 %247
  %v250 = vmul.f32 %v232, %v248
  %v251 = vpack.c.bf16 %v250, %v250
  %v256 = vunpack.c.l.b16 %v159
  %v257 = vunpack.c.l.b16 %v160
  %v258 = vunpack.c.l.b16 %v161
  %v259 = vunpack.c.l.b16 %v162
  %v260 = vpack.c.b16 %v257, %v256
  %v261 = vpack.c.b16 %v259, %v258
  %264 = vmatprep.subr.bf16.mxu0 0
  %265 = vmatpush1.bf16.msra.mxu0 0
  %266 = vmatprep.subr.bf16.mxu0 0
  %267 = vmatpush1.bf16.msra.mxu0 0
  %268 = vmatprep.subr.bf16.mxu0 0
  %269 = vmatpush1.bf16.msra.mxu0 0
  %270 = vmatprep.subr.bf16.mxu0 0
  %271 = vmatpush1.bf16.msra.mxu0 0
  %272 = vmatprep.subr.bf16.mxu0 0
  %273 = vmatpush1.bf16.msra.mxu0 0
  %274 = vmatprep.subr.bf16.mxu0 0
  %275 = vmatpush1.bf16.msra.mxu0 0
  %276 = vmatprep.subr.bf16.mxu0 0
  %277 = vmatpush1.bf16.msra.mxu0 %v261
  %278 = vmatprep.subr.bf16.mxu0 0
  %279 = vmatpush1.bf16.msra.mxu0 %v260
  %280 = vmatprep.subr.bf16.mxu0 0
  %281 = vmatpush2.bf16.msra.mxu0 0
  %282 = vmatprep.subr.bf16.mxu0 0
  %283 = vmatpush2.bf16.msra.mxu0 0
  %284 = vmatprep.subr.bf16.mxu0 0
  %285 = vmatpush2.bf16.msra.mxu0 0
  %286 = vmatprep.subr.bf16.mxu0 0
  %287 = vmatpush2.bf16.msra.mxu0 0
  %288 = vmatprep.subr.bf16.mxu0 0
  %289 = vmatpush2.bf16.msra.mxu0 0
  %290 = vmatprep.subr.bf16.mxu0 0
  %291 = vmatpush2.bf16.msra.mxu0 0
  %292 = vmatprep.subr.bf16.mxu0 0
  %293 = vmatpush2.bf16.msra.mxu0 0
  %294 = vmatprep.subr.bf16.mxu0 0
  %295 = vmatpush2.bf16.msra.mxu0 0
  %296 = vmatprep.mubr.bf16.mxu0 0
  %297 = vmatmul.mubr.bf16.gmra.mxu0 %v184
  %v298 = vpop.f32.mrf.mxu0
  %v299 = vadd.f32 0.0, %v298
  %v300 = vpop.f32.mrf.mxu0
  %v301 = vpop.f32.mrf.mxu0
  %v302 = vpop.f32.mrf.mxu0
  %303 = vdwg.mxu0
  %305 = vrot.lane.b32.xlu0 %v251, 32
  %v306 = vpop.permute.xlu0 %305
  %v311 = vunpack.c.l.b16 %v155
  %v312 = vunpack.c.l.b16 %v156
  %v313 = vunpack.c.l.b16 %v157
  %v314 = vunpack.c.l.b16 %v158
  %v315 = vpack.c.b16 %v312, %v311
  %v316 = vpack.c.b16 %v314, %v313
  %v320 = vsel %vm182, %v306, 0
  %322 = vmatprep.subr.bf16.mxu0 0
  %323 = vmatpush1.bf16.msra.mxu0 0
  %324 = vmatprep.subr.bf16.mxu0 0
  %325 = vmatpush1.bf16.msra.mxu0 0
  %326 = vmatprep.subr.bf16.mxu0 0
  %327 = vmatpush1.bf16.msra.mxu0 0
  %328 = vmatprep.subr.bf16.mxu0 0
  %329 = vmatpush1.bf16.msra.mxu0 0
  %330 = vmatprep.subr.bf16.mxu0 0
  %331 = vmatpush1.bf16.msra.mxu0 0
  %332 = vmatprep.subr.bf16.mxu0 0
  %333 = vmatpush1.bf16.msra.mxu0 0
  %334 = vmatprep.subr.bf16.mxu0 0
  %335 = vmatpush1.bf16.msra.mxu0 %v316
  %336 = vmatprep.subr.bf16.mxu0 0
  %337 = vmatpush1.bf16.msra.mxu0 %v315
  %338 = vmatprep.subr.bf16.mxu0 0
  %339 = vmatpush2.bf16.msra.mxu0 0
  %340 = vmatprep.subr.bf16.mxu0 0
  %341 = vmatpush2.bf16.msra.mxu0 0
  %342 = vmatprep.subr.bf16.mxu0 0
  %343 = vmatpush2.bf16.msra.mxu0 0
  %344 = vmatprep.subr.bf16.mxu0 0
  %345 = vmatpush2.bf16.msra.mxu0 0
  %346 = vmatprep.subr.bf16.mxu0 0
  %347 = vmatpush2.bf16.msra.mxu0 0
  %348 = vmatprep.subr.bf16.mxu0 0
  %349 = vmatpush2.bf16.msra.mxu0 0
  %350 = vmatprep.subr.bf16.mxu0 0
  %351 = vmatpush2.bf16.msra.mxu0 0
  %352 = vmatprep.subr.bf16.mxu0 0
  %353 = vmatpush2.bf16.msra.mxu0 0
  %354 = vmatprep.mubr.bf16.mxu0 0
  %355 = vmatmul.mubr.bf16.gmra.mxu0 %v320
  %v356 = vpop.f32.mrf.mxu0
  %v357 = vadd.f32 %v299, %v356
  %v358 = vpop.f32.mrf.mxu0
  %v359 = vpop.f32.mrf.mxu0
  %v360 = vpop.f32.mrf.mxu0
  %361 = vdwg.mxu0
  %v362 = vadd.f32 %v357, %v168
  %v363 = vxor.u32 %v362, 2147483648
  %v364 = vmul.f32 %v363, 1.442695
  %v365 = vpow.pop %v364
  %v366 = vadd.f32 %v365, 1.0
  %v367 = vrcp.pop %v366
  %v368 = vmul.f32 1.0, %v367
  %v369 = vtanh.pop %v362
  %v370 = vmul.f32 %v368, 0.0
  %372 = vrot.lane.b32.xlu0 %v369, 64
  %v373 = vpop.permute.xlu0 %372
  %v375 = vmul.f32 %v368, %v373
  %377 = vrot.lane.b32.xlu0 %v375, 32
  %v378 = vpop.permute.xlu0 %377
  %v380 = vadd.f32 %v370, %v378
  %v381 = vtanh.pop %v380
  %383 = vrot.lane.b32.xlu0 %v381, 64
  %v384 = vpop.permute.xlu0 %383
  %v386 = vmul.f32 %v368, %v384
  %387 = vmatprep.subr.bf16.mxu0 0
  %388 = vmatpush1.bf16.msra.mxu0 0
  %389 = vmatprep.subr.bf16.mxu0 0
  %390 = vmatpush1.bf16.msra.mxu0 0
  %391 = vmatprep.subr.bf16.mxu0 0
  %392 = vmatpush1.bf16.msra.mxu0 0
  %393 = vmatprep.subr.bf16.mxu0 0
  %394 = vmatpush1.bf16.msra.mxu0 0
  %395 = vmatprep.subr.bf16.mxu0 0
  %396 = vmatpush1.bf16.msra.mxu0 0
  %397 = vmatprep.subr.bf16.mxu0 0
  %398 = vmatpush1.bf16.msra.mxu0 0
  %399 = vmatprep.subr.bf16.mxu0 0
  %400 = vmatpush1.bf16.msra.mxu0 %v179
  %401 = vmatprep.subr.bf16.mxu0 0
  %402 = vmatpush1.bf16.msra.mxu0 %v178
  %403 = vmatprep.subr.bf16.mxu0 0
  %404 = vmatpush2.bf16.msra.mxu0 0
  %405 = vmatprep.subr.bf16.mxu0 0
  %406 = vmatpush2.bf16.msra.mxu0 0
  %407 = vmatprep.subr.bf16.mxu0 0
  %408 = vmatpush2.bf16.msra.mxu0 0
  %409 = vmatprep.subr.bf16.mxu0 0
  %410 = vmatpush2.bf16.msra.mxu0 0
  %411 = vmatprep.subr.bf16.mxu0 0
  %412 = vmatpush2.bf16.msra.mxu0 0
  %413 = vmatprep.subr.bf16.mxu0 0
  %414 = vmatpush2.bf16.msra.mxu0 0
  %415 = vmatprep.subr.bf16.mxu0 0
  %416 = vmatpush2.bf16.msra.mxu0 0
  %417 = vmatprep.subr.bf16.mxu0 0
  %418 = vmatpush2.bf16.msra.mxu0 0
  %419 = vmatprep.mubr.bf16.mxu0 0
  %420 = vmatmul.mubr.bf16.gmra.mxu0 %v320
  %v421 = vpop.f32.mrf.mxu0
  %v422 = vadd.f32 0.0, %v421
  %v423 = vpop.f32.mrf.mxu0
  %v424 = vpop.f32.mrf.mxu0
  %v425 = vpop.f32.mrf.mxu0
  %426 = vdwg.mxu0
  %v427 = vadd.f32 %v124, %v422
  %v428 = vxor.u32 %v427, 2147483648
  %v429 = vmul.f32 %v428, 1.442695
  %v430 = vpow.pop %v429
  %v431 = vadd.f32 %v430, 1.0
  %v432 = vrcp.pop %v431
  %v433 = vmul.f32 1.0, %v432
  %v434 = vtanh.pop %v427
  %v435 = vmul.f32 %v433, %v244
  %437 = vrot.lane.b32.xlu0 %v434, 64
  %v438 = vpop.permute.xlu0 %437
  %v440 = vmul.f32 %v433, %v438
  %442 = vrot.lane.b32.xlu0 %v440, 32
  %v443 = vpop.permute.xlu0 %442
  %v445 = vadd.f32 %v435, %v443
  %v446 = vtanh.pop %v445
  %448 = vrot.lane.b32.xlu0 %v446, 64
  %v449 = vpop.permute.xlu0 %448
  %v451 = vmul.f32 %v433, %v449
  %v452 = vpack.c.bf16 %v451, %v451
  %v453 = vpack.c.bf16 %v386, %v386
  %455 = vrot.lane.b32.xlu0 %v453, 32
  %v456 = vpop.permute.xlu0 %455
  %v458 = vsel %vm182, %v456, 0
  %460 = vmatprep.subr.bf16.mxu0 0
  %461 = vmatpush1.bf16.msra.mxu0 0
  %462 = vmatprep.subr.bf16.mxu0 0
  %463 = vmatpush1.bf16.msra.mxu0 0
  %464 = vmatprep.subr.bf16.mxu0 0
  %465 = vmatpush1.bf16.msra.mxu0 0
  %466 = vmatprep.subr.bf16.mxu0 0
  %467 = vmatpush1.bf16.msra.mxu0 0
  %468 = vmatprep.subr.bf16.mxu0 0
  %469 = vmatpush1.bf16.msra.mxu0 0
  %470 = vmatprep.subr.bf16.mxu0 0
  %471 = vmatpush1.bf16.msra.mxu0 0
  %472 = vmatprep.subr.bf16.mxu0 0
  %473 = vmatpush1.bf16.msra.mxu0 %v261
  %474 = vmatprep.subr.bf16.mxu0 0
  %475 = vmatpush1.bf16.msra.mxu0 %v260
  %476 = vmatprep.subr.bf16.mxu0 0
  %477 = vmatpush2.bf16.msra.mxu0 0
  %478 = vmatprep.subr.bf16.mxu0 0
  %479 = vmatpush2.bf16.msra.mxu0 0
  %480 = vmatprep.subr.bf16.mxu0 0
  %481 = vmatpush2.bf16.msra.mxu0 0
  %482 = vmatprep.subr.bf16.mxu0 0
  %483 = vmatpush2.bf16.msra.mxu0 0
  %484 = vmatprep.subr.bf16.mxu0 0
  %485 = vmatpush2.bf16.msra.mxu0 0
  %486 = vmatprep.subr.bf16.mxu0 0
  %487 = vmatpush2.bf16.msra.mxu0 0
  %488 = vmatprep.subr.bf16.mxu0 0
  %489 = vmatpush2.bf16.msra.mxu0 0
  %490 = vmatprep.subr.bf16.mxu0 0
  %491 = vmatpush2.bf16.msra.mxu0 0
  %492 = vmatprep.mubr.bf16.mxu0 0
  %493 = vmatmul.mubr.bf16.gmra.mxu0 %v458
  %v494 = vpop.f32.mrf.mxu0
  %v495 = vadd.f32 0.0, %v494
  %v496 = vpop.f32.mrf.mxu0
  %v497 = vpop.f32.mrf.mxu0
  %v498 = vpop.f32.mrf.mxu0
  %499 = vdwg.mxu0
  %501 = vrot.lane.b32.xlu0 %v452, 32
  %v502 = vpop.permute.xlu0 %501
  %v504 = vsel %vm182, %v502, 0
  %506 = vmatprep.subr.bf16.mxu0 0
  %507 = vmatpush1.bf16.msra.mxu0 0
  %508 = vmatprep.subr.bf16.mxu0 0
  %509 = vmatpush1.bf16.msra.mxu0 0
  %510 = vmatprep.subr.bf16.mxu0 0
  %511 = vmatpush1.bf16.msra.mxu0 0
  %512 = vmatprep.subr.bf16.mxu0 0
  %513 = vmatpush1.bf16.msra.mxu0 0
  %514 = vmatprep.subr.bf16.mxu0 0
  %515 = vmatpush1.bf16.msra.mxu0 0
  %516 = vmatprep.subr.bf16.mxu0 0
  %517 = vmatpush1.bf16.msra.mxu0 0
  %518 = vmatprep.subr.bf16.mxu0 0
  %519 = vmatpush1.bf16.msra.mxu0 %v316
  %520 = vmatprep.subr.bf16.mxu0 0
  %521 = vmatpush1.bf16.msra.mxu0 %v315
  %522 = vmatprep.subr.bf16.mxu0 0
  %523 = vmatpush2.bf16.msra.mxu0 0
  %524 = vmatprep.subr.bf16.mxu0 0
  %525 = vmatpush2.bf16.msra.mxu0 0
  %526 = vmatprep.subr.bf16.mxu0 0
  %527 = vmatpush2.bf16.msra.mxu0 0
  %528 = vmatprep.subr.bf16.mxu0 0
  %529 = vmatpush2.bf16.msra.mxu0 0
  %530 = vmatprep.subr.bf16.mxu0 0
  %531 = vmatpush2.bf16.msra.mxu0 0
  %532 = vmatprep.subr.bf16.mxu0 0
  %533 = vmatpush2.bf16.msra.mxu0 0
  %534 = vmatprep.subr.bf16.mxu0 0
  %535 = vmatpush2.bf16.msra.mxu0 0
  %536 = vmatprep.subr.bf16.mxu0 0
  %537 = vmatpush2.bf16.msra.mxu0 0
  %538 = vmatprep.mubr.bf16.mxu0 0
  %539 = vmatmul.mubr.bf16.gmra.mxu0 %v504
  %v540 = vpop.f32.mrf.mxu0
  %v541 = vadd.f32 %v495, %v540
  %v542 = vpop.f32.mrf.mxu0
  %v543 = vpop.f32.mrf.mxu0
  %v544 = vpop.f32.mrf.mxu0
  %545 = vdwg.mxu0
  %v546 = vadd.f32 %v541, %v168
  %v547 = vxor.u32 %v546, 2147483648
  %v548 = vmul.f32 %v547, 1.442695
  %v549 = vpow.pop %v548
  %v550 = vadd.f32 %v549, 1.0
  %v551 = vrcp.pop %v550
  %v552 = vmul.f32 1.0, %v551
  %v553 = vtanh.pop %v546
  %v554 = vmul.f32 %v552, %v380
  %556 = vrot.lane.b32.xlu0 %v553, 64
  %v557 = vpop.permute.xlu0 %556
  %v559 = vmul.f32 %v552, %v557
  %561 = vrot.lane.b32.xlu0 %v559, 32
  %v562 = vpop.permute.xlu0 %561
  %v564 = vadd.f32 %v554, %v562
  %v565 = vtanh.pop %v564
  %567 = vrot.lane.b32.xlu0 %v565, 64
  %v568 = vpop.permute.xlu0 %567
  %v570 = vmul.f32 %v552, %v568
  %571 = vmatprep.subr.bf16.mxu0 0
  %572 = vmatpush1.bf16.msra.mxu0 0
  %573 = vmatprep.subr.bf16.mxu0 0
  %574 = vmatpush1.bf16.msra.mxu0 0
  %575 = vmatprep.subr.bf16.mxu0 0
  %576 = vmatpush1.bf16.msra.mxu0 0
  %577 = vmatprep.subr.bf16.mxu0 0
  %578 = vmatpush1.bf16.msra.mxu0 0
  %579 = vmatprep.subr.bf16.mxu0 0
  %580 = vmatpush1.bf16.msra.mxu0 0
  %581 = vmatprep.subr.bf16.mxu0 0
  %582 = vmatpush1.bf16.msra.mxu0 0
  %583 = vmatprep.subr.bf16.mxu0 0
  %584 = vmatpush1.bf16.msra.mxu0 %v179
  %585 = vmatprep.subr.bf16.mxu0 0
  %586 = vmatpush1.bf16.msra.mxu0 %v178
  %587 = vmatprep.subr.bf16.mxu0 0
  %588 = vmatpush2.bf16.msra.mxu0 0
  %589 = vmatprep.subr.bf16.mxu0 0
  %590 = vmatpush2.bf16.msra.mxu0 0
  %591 = vmatprep.subr.bf16.mxu0 0
  %592 = vmatpush2.bf16.msra.mxu0 0
  %593 = vmatprep.subr.bf16.mxu0 0
  %594 = vmatpush2.bf16.msra.mxu0 0
  %595 = vmatprep.subr.bf16.mxu0 0
  %596 = vmatpush2.bf16.msra.mxu0 0
  %597 = vmatprep.subr.bf16.mxu0 0
  %598 = vmatpush2.bf16.msra.mxu0 0
  %599 = vmatprep.subr.bf16.mxu0 0
  %600 = vmatpush2.bf16.msra.mxu0 0
  %601 = vmatprep.subr.bf16.mxu0 0
  %602 = vmatpush2.bf16.msra.mxu0 0
  %603 = vmatprep.mubr.bf16.mxu0 0
  %604 = vmatmul.mubr.bf16.gmra.mxu0 %v504
  %v605 = vpop.f32.mrf.mxu0
  %v606 = vadd.f32 0.0, %v605
  %v607 = vpop.f32.mrf.mxu0
  %v608 = vpop.f32.mrf.mxu0
  %v609 = vpop.f32.mrf.mxu0
  %610 = vdwg.mxu0
  %v611 = vadd.f32 %v129, %v606
  %v612 = vxor.u32 %v611, 2147483648
  %v613 = vmul.f32 %v612, 1.442695
  %v614 = vpow.pop %v613
  %v615 = vadd.f32 %v614, 1.0
  %v616 = vrcp.pop %v615
  %v617 = vmul.f32 1.0, %v616
  %v618 = vtanh.pop %v611
  %v619 = vmul.f32 %v617, %v445
  %621 = vrot.lane.b32.xlu0 %v618, 64
  %v622 = vpop.permute.xlu0 %621
  %v624 = vmul.f32 %v617, %v622
  %626 = vrot.lane.b32.xlu0 %v624, 32
  %v627 = vpop.permute.xlu0 %626
  %v629 = vadd.f32 %v619, %v627
  %v630 = vtanh.pop %v629
  %632 = vrot.lane.b32.xlu0 %v630, 64
  %v633 = vpop.permute.xlu0 %632
  %v635 = vmul.f32 %v617, %v633
  %v636 = vpack.c.bf16 %v635, %v635
  %v637 = vpack.c.bf16 %v570, %v570
  %639 = vrot.lane.b32.xlu0 %v637, 32
  %v640 = vpop.permute.xlu0 %639
  %v642 = vsel %vm182, %v640, 0
  %644 = vmatprep.subr.bf16.mxu0 0
  %645 = vmatpush1.bf16.msra.mxu0 0
  %646 = vmatprep.subr.bf16.mxu0 0
  %647 = vmatpush1.bf16.msra.mxu0 0
  %648 = vmatprep.subr.bf16.mxu0 0
  %649 = vmatpush1.bf16.msra.mxu0 0
  %650 = vmatprep.subr.bf16.mxu0 0
  %651 = vmatpush1.bf16.msra.mxu0 0
  %652 = vmatprep.subr.bf16.mxu0 0
  %653 = vmatpush1.bf16.msra.mxu0 0
  %654 = vmatprep.subr.bf16.mxu0 0
  %655 = vmatpush1.bf16.msra.mxu0 0
  %656 = vmatprep.subr.bf16.mxu0 0
  %657 = vmatpush1.bf16.msra.mxu0 %v261
  %658 = vmatprep.subr.bf16.mxu0 0
  %659 = vmatpush1.bf16.msra.mxu0 %v260
  %660 = vmatprep.subr.bf16.mxu0 0
  %661 = vmatpush2.bf16.msra.mxu0 0
  %662 = vmatprep.subr.bf16.mxu0 0
  %663 = vmatpush2.bf16.msra.mxu0 0
  %664 = vmatprep.subr.bf16.mxu0 0
  %665 = vmatpush2.bf16.msra.mxu0 0
  %666 = vmatprep.subr.bf16.mxu0 0
  %667 = vmatpush2.bf16.msra.mxu0 0
  %668 = vmatprep.subr.bf16.mxu0 0
  %669 = vmatpush2.bf16.msra.mxu0 0
  %670 = vmatprep.subr.bf16.mxu0 0
  %671 = vmatpush2.bf16.msra.mxu0 0
  %672 = vmatprep.subr.bf16.mxu0 0
  %673 = vmatpush2.bf16.msra.mxu0 0
  %674 = vmatprep.subr.bf16.mxu0 0
  %675 = vmatpush2.bf16.msra.mxu0 0
  %676 = vmatprep.mubr.bf16.mxu0 0
  %677 = vmatmul.mubr.bf16.gmra.mxu0 %v642
  %v678 = vpop.f32.mrf.mxu0
  %v679 = vadd.f32 0.0, %v678
  %v680 = vpop.f32.mrf.mxu0
  %v681 = vpop.f32.mrf.mxu0
  %v682 = vpop.f32.mrf.mxu0
  %683 = vdwg.mxu0
  %685 = vrot.lane.b32.xlu0 %v636, 32
  %v686 = vpop.permute.xlu0 %685
  %v688 = vsel %vm182, %v686, 0
  %690 = vmatprep.subr.bf16.mxu0 0
  %691 = vmatpush1.bf16.msra.mxu0 0
  %692 = vmatprep.subr.bf16.mxu0 0
  %693 = vmatpush1.bf16.msra.mxu0 0
  %694 = vmatprep.subr.bf16.mxu0 0
  %695 = vmatpush1.bf16.msra.mxu0 0
  %696 = vmatprep.subr.bf16.mxu0 0
  %697 = vmatpush1.bf16.msra.mxu0 0
  %698 = vmatprep.subr.bf16.mxu0 0
  %699 = vmatpush1.bf16.msra.mxu0 0
  %700 = vmatprep.subr.bf16.mxu0 0
  %701 = vmatpush1.bf16.msra.mxu0 0
  %702 = vmatprep.subr.bf16.mxu0 0
  %703 = vmatpush1.bf16.msra.mxu0 %v316
  %704 = vmatprep.subr.bf16.mxu0 0
  %705 = vmatpush1.bf16.msra.mxu0 %v315
  %706 = vmatprep.subr.bf16.mxu0 0
  %707 = vmatpush2.bf16.msra.mxu0 0
  %708 = vmatprep.subr.bf16.mxu0 0
  %709 = vmatpush2.bf16.msra.mxu0 0
  %710 = vmatprep.subr.bf16.mxu0 0
  %711 = vmatpush2.bf16.msra.mxu0 0
  %712 = vmatprep.subr.bf16.mxu0 0
  %713 = vmatpush2.bf16.msra.mxu0 0
  %714 = vmatprep.subr.bf16.mxu0 0
  %715 = vmatpush2.bf16.msra.mxu0 0
  %716 = vmatprep.subr.bf16.mxu0 0
  %717 = vmatpush2.bf16.msra.mxu0 0
  %718 = vmatprep.subr.bf16.mxu0 0
  %719 = vmatpush2.bf16.msra.mxu0 0
  %720 = vmatprep.subr.bf16.mxu0 0
  %721 = vmatpush2.bf16.msra.mxu0 0
  %722 = vmatprep.mubr.bf16.mxu0 0
  %723 = vmatmul.mubr.bf16.gmra.mxu0 %v688
  %v724 = vpop.f32.mrf.mxu0
  %v725 = vadd.f32 %v679, %v724
  %v726 = vpop.f32.mrf.mxu0
  %v727 = vpop.f32.mrf.mxu0
  %v728 = vpop.f32.mrf.mxu0
  %729 = vdwg.mxu0
  %v730 = vadd.f32 %v725, %v168
  %v731 = vxor.u32 %v730, 2147483648
  %v732 = vmul.f32 %v731, 1.442695
  %v733 = vpow.pop %v732
  %v734 = vadd.f32 %v733, 1.0
  %v735 = vrcp.pop %v734
  %v736 = vmul.f32 1.0, %v735
  %v737 = vtanh.pop %v730
  %v738 = vmul.f32 %v736, %v564
  %740 = vrot.lane.b32.xlu0 %v737, 64
  %v741 = vpop.permute.xlu0 %740
  %v743 = vmul.f32 %v736, %v741
  %745 = vrot.lane.b32.xlu0 %v743, 32
  %v746 = vpop.permute.xlu0 %745
  %v748 = vadd.f32 %v738, %v746
  %v749 = vtanh.pop %v748
  %751 = vrot.lane.b32.xlu0 %v749, 64
  %v752 = vpop.permute.xlu0 %751
  %v754 = vmul.f32 %v736, %v752
  %755 = vmatprep.subr.bf16.mxu0 0
  %756 = vmatpush1.bf16.msra.mxu0 0
  %757 = vmatprep.subr.bf16.mxu0 0
  %758 = vmatpush1.bf16.msra.mxu0 0
  %759 = vmatprep.subr.bf16.mxu0 0
  %760 = vmatpush1.bf16.msra.mxu0 0
  %761 = vmatprep.subr.bf16.mxu0 0
  %762 = vmatpush1.bf16.msra.mxu0 0
  %763 = vmatprep.subr.bf16.mxu0 0
  %764 = vmatpush1.bf16.msra.mxu0 0
  %765 = vmatprep.subr.bf16.mxu0 0
  %766 = vmatpush1.bf16.msra.mxu0 0
  %767 = vmatprep.subr.bf16.mxu0 0
  %768 = vmatpush1.bf16.msra.mxu0 %v179
  %769 = vmatprep.subr.bf16.mxu0 0
  %770 = vmatpush1.bf16.msra.mxu0 %v178
  %771 = vmatprep.subr.bf16.mxu0 0
  %772 = vmatpush2.bf16.msra.mxu0 0
  %773 = vmatprep.subr.bf16.mxu0 0
  %774 = vmatpush2.bf16.msra.mxu0 0
  %775 = vmatprep.subr.bf16.mxu0 0
  %776 = vmatpush2.bf16.msra.mxu0 0
  %777 = vmatprep.subr.bf16.mxu0 0
  %778 = vmatpush2.bf16.msra.mxu0 0
  %779 = vmatprep.subr.bf16.mxu0 0
  %780 = vmatpush2.bf16.msra.mxu0 0
  %781 = vmatprep.subr.bf16.mxu0 0
  %782 = vmatpush2.bf16.msra.mxu0 0
  %783 = vmatprep.subr.bf16.mxu0 0
  %784 = vmatpush2.bf16.msra.mxu0 0
  %785 = vmatprep.subr.bf16.mxu0 0
  %786 = vmatpush2.bf16.msra.mxu0 0
  %787 = vmatprep.mubr.bf16.mxu0 0
  %788 = vmatmul.mubr.bf16.gmra.mxu0 %v688
  %v789 = vpop.f32.mrf.mxu0
  %v790 = vadd.f32 0.0, %v789
  %v791 = vpop.f32.mrf.mxu0
  %v792 = vpop.f32.mrf.mxu0
  %v793 = vpop.f32.mrf.mxu0
  %794 = vdwg.mxu0
  %v795 = vadd.f32 %v132, %v790
  %v796 = vxor.u32 %v795, 2147483648
  %v797 = vmul.f32 %v796, 1.442695
  %v798 = vpow.pop %v797
  %v799 = vadd.f32 %v798, 1.0
  %v800 = vrcp.pop %v799
  %v801 = vmul.f32 1.0, %v800
  %v802 = vtanh.pop %v795
  %v803 = vmul.f32 %v801, %v629
  %805 = vrot.lane.b32.xlu0 %v802, 64
  %v806 = vpop.permute.xlu0 %805
  %v808 = vmul.f32 %v801, %v806
  %810 = vrot.lane.b32.xlu0 %v808, 32
  %v811 = vpop.permute.xlu0 %810
  %v813 = vadd.f32 %v803, %v811
  %v814 = vtanh.pop %v813
  %816 = vrot.lane.b32.xlu0 %v814, 64
  %v817 = vpop.permute.xlu0 %816
  %v819 = vmul.f32 %v801, %v817
  %v820 = vpack.c.bf16 %v819, %v819
  %v821 = vpack.c.bf16 %v754, %v754
  %823 = vrot.lane.b32.xlu0 %v821, 32
  %v824 = vpop.permute.xlu0 %823
  %v826 = vsel %vm182, %v824, 0
  %828 = vmatprep.subr.bf16.mxu0 0
  %829 = vmatpush1.bf16.msra.mxu0 0
  %830 = vmatprep.subr.bf16.mxu0 0
  %831 = vmatpush1.bf16.msra.mxu0 0
  %832 = vmatprep.subr.bf16.mxu0 0
  %833 = vmatpush1.bf16.msra.mxu0 0
  %834 = vmatprep.subr.bf16.mxu0 0
  %835 = vmatpush1.bf16.msra.mxu0 0
  %836 = vmatprep.subr.bf16.mxu0 0
  %837 = vmatpush1.bf16.msra.mxu0 0
  %838 = vmatprep.subr.bf16.mxu0 0
  %839 = vmatpush1.bf16.msra.mxu0 0
  %840 = vmatprep.subr.bf16.mxu0 0
  %841 = vmatpush1.bf16.msra.mxu0 %v261
  %842 = vmatprep.subr.bf16.mxu0 0
  %843 = vmatpush1.bf16.msra.mxu0 %v260
  %844 = vmatprep.subr.bf16.mxu0 0
  %845 = vmatpush2.bf16.msra.mxu0 0
  %846 = vmatprep.subr.bf16.mxu0 0
  %847 = vmatpush2.bf16.msra.mxu0 0
  %848 = vmatprep.subr.bf16.mxu0 0
  %849 = vmatpush2.bf16.msra.mxu0 0
  %850 = vmatprep.subr.bf16.mxu0 0
  %851 = vmatpush2.bf16.msra.mxu0 0
  %852 = vmatprep.subr.bf16.mxu0 0
  %853 = vmatpush2.bf16.msra.mxu0 0
  %854 = vmatprep.subr.bf16.mxu0 0
  %855 = vmatpush2.bf16.msra.mxu0 0
  %856 = vmatprep.subr.bf16.mxu0 0
  %857 = vmatpush2.bf16.msra.mxu0 0
  %858 = vmatprep.subr.bf16.mxu0 0
  %859 = vmatpush2.bf16.msra.mxu0 0
  %860 = vmatprep.mubr.bf16.mxu0 0
  %861 = vmatmul.mubr.bf16.gmra.mxu0 %v826
  %v862 = vpop.f32.mrf.mxu0
  %v863 = vadd.f32 0.0, %v862
  %v864 = vpop.f32.mrf.mxu0
  %v865 = vpop.f32.mrf.mxu0
  %v866 = vpop.f32.mrf.mxu0
  %867 = vdwg.mxu0
  %869 = vrot.lane.b32.xlu0 %v820, 32
  %v870 = vpop.permute.xlu0 %869
  %v872 = vsel %vm182, %v870, 0
  %874 = vmatprep.subr.bf16.mxu0 0
  %875 = vmatpush1.bf16.msra.mxu0 0
  %876 = vmatprep.subr.bf16.mxu0 0
  %877 = vmatpush1.bf16.msra.mxu0 0
  %878 = vmatprep.subr.bf16.mxu0 0
  %879 = vmatpush1.bf16.msra.mxu0 0
  %880 = vmatprep.subr.bf16.mxu0 0
  %881 = vmatpush1.bf16.msra.mxu0 0
  %882 = vmatprep.subr.bf16.mxu0 0
  %883 = vmatpush1.bf16.msra.mxu0 0
  %884 = vmatprep.subr.bf16.mxu0 0
  %885 = vmatpush1.bf16.msra.mxu0 0
  %886 = vmatprep.subr.bf16.mxu0 0
  %887 = vmatpush1.bf16.msra.mxu0 %v316
  %888 = vmatprep.subr.bf16.mxu0 0
  %889 = vmatpush1.bf16.msra.mxu0 %v315
  %890 = vmatprep.subr.bf16.mxu0 0
  %891 = vmatpush2.bf16.msra.mxu0 0
  %892 = vmatprep.subr.bf16.mxu0 0
  %893 = vmatpush2.bf16.msra.mxu0 0
  %894 = vmatprep.subr.bf16.mxu0 0
  %895 = vmatpush2.bf16.msra.mxu0 0
  %896 = vmatprep.subr.bf16.mxu0 0
  %897 = vmatpush2.bf16.msra.mxu0 0
  %898 = vmatprep.subr.bf16.mxu0 0
  %899 = vmatpush2.bf16.msra.mxu0 0
  %900 = vmatprep.subr.bf16.mxu0 0
  %901 = vmatpush2.bf16.msra.mxu0 0
  %902 = vmatprep.subr.bf16.mxu0 0
  %903 = vmatpush2.bf16.msra.mxu0 0
  %904 = vmatprep.subr.bf16.mxu0 0
  %905 = vmatpush2.bf16.msra.mxu0 0
  %906 = vmatprep.mubr.bf16.mxu0 0
  %907 = vmatmul.mubr.bf16.gmra.mxu0 %v872
  %v908 = vpop.f32.mrf.mxu0
  %v909 = vadd.f32 %v863, %v908
  %v910 = vpop.f32.mrf.mxu0
  %v911 = vpop.f32.mrf.mxu0
  %v912 = vpop.f32.mrf.mxu0
  %913 = vdwg.mxu0
  %v914 = vadd.f32 %v909, %v168
  %v915 = vxor.u32 %v914, 2147483648
  %v916 = vmul.f32 %v915, 1.442695
  %v917 = vpow.pop %v916
  %v918 = vadd.f32 %v917, 1.0
  %v919 = vrcp.pop %v918
  %v920 = vmul.f32 1.0, %v919
  %v921 = vtanh.pop %v914
  %v922 = vmul.f32 %v920, %v748
  %924 = vrot.lane.b32.xlu0 %v921, 64
  %v925 = vpop.permute.xlu0 %924
  %v927 = vmul.f32 %v920, %v925
  %929 = vrot.lane.b32.xlu0 %v927, 32
  %v930 = vpop.permute.xlu0 %929
  %v932 = vadd.f32 %v922, %v930
  %v933 = vtanh.pop %v932
  %935 = vrot.lane.b32.xlu0 %v933, 64
  %v936 = vpop.permute.xlu0 %935
  %v938 = vmul.f32 %v920, %v936
  %939 = vmatprep.subr.bf16.mxu0 0
  %940 = vmatpush1.bf16.msra.mxu0 0
  %941 = vmatprep.subr.bf16.mxu0 0
  %942 = vmatpush1.bf16.msra.mxu0 0
  %943 = vmatprep.subr.bf16.mxu0 0
  %944 = vmatpush1.bf16.msra.mxu0 0
  %945 = vmatprep.subr.bf16.mxu0 0
  %946 = vmatpush1.bf16.msra.mxu0 0
  %947 = vmatprep.subr.bf16.mxu0 0
  %948 = vmatpush1.bf16.msra.mxu0 0
  %949 = vmatprep.subr.bf16.mxu0 0
  %950 = vmatpush1.bf16.msra.mxu0 0
  %951 = vmatprep.subr.bf16.mxu0 0
  %952 = vmatpush1.bf16.msra.mxu0 %v179
  %953 = vmatprep.subr.bf16.mxu0 0
  %954 = vmatpush1.bf16.msra.mxu0 %v178
  %955 = vmatprep.subr.bf16.mxu0 0
  %956 = vmatpush2.bf16.msra.mxu0 0
  %957 = vmatprep.subr.bf16.mxu0 0
  %958 = vmatpush2.bf16.msra.mxu0 0
  %959 = vmatprep.subr.bf16.mxu0 0
  %960 = vmatpush2.bf16.msra.mxu0 0
  %961 = vmatprep.subr.bf16.mxu0 0
  %962 = vmatpush2.bf16.msra.mxu0 0
  %963 = vmatprep.subr.bf16.mxu0 0
  %964 = vmatpush2.bf16.msra.mxu0 0
  %965 = vmatprep.subr.bf16.mxu0 0
  %966 = vmatpush2.bf16.msra.mxu0 0
  %967 = vmatprep.subr.bf16.mxu0 0
  %968 = vmatpush2.bf16.msra.mxu0 0
  %969 = vmatprep.subr.bf16.mxu0 0
  %970 = vmatpush2.bf16.msra.mxu0 0
  %971 = vmatprep.mubr.bf16.mxu0 0
  %972 = vmatmul.mubr.bf16.gmra.mxu0 %v872
  %v973 = vpop.f32.mrf.mxu0
  %v974 = vadd.f32 0.0, %v973
  %v975 = vpop.f32.mrf.mxu0
  %v976 = vpop.f32.mrf.mxu0
  %v977 = vpop.f32.mrf.mxu0
  %978 = vdwg.mxu0
  %v979 = vadd.f32 %v137, %v974
  %v980 = vxor.u32 %v979, 2147483648
  %v981 = vmul.f32 %v980, 1.442695
  %v982 = vpow.pop %v981
  %v983 = vadd.f32 %v982, 1.0
  %v984 = vrcp.pop %v983
  %v985 = vmul.f32 1.0, %v984
  %v986 = vtanh.pop %v979
  %v987 = vmul.f32 %v985, %v813
  %989 = vrot.lane.b32.xlu0 %v986, 64
  %v990 = vpop.permute.xlu0 %989
  %v992 = vmul.f32 %v985, %v990
  %994 = vrot.lane.b32.xlu0 %v992, 32
  %v995 = vpop.permute.xlu0 %994
  %v997 = vadd.f32 %v987, %v995
  %v998 = vtanh.pop %v997
  %1000 = vrot.lane.b32.xlu0 %v998, 64
  %v1001 = vpop.permute.xlu0 %1000
  %v1003 = vmul.f32 %v985, %v1001
  %v1004 = vpack.c.bf16 %v1003, %v1003
  %v1005 = vpack.c.bf16 %v938, %v938
  %1007 = vrot.lane.b32.xlu0 %v1005, 32
  %v1008 = vpop.permute.xlu0 %1007
  %v1010 = vsel %vm182, %v1008, 0
  %1012 = vmatprep.subr.bf16.mxu0 0
  %1013 = vmatpush1.bf16.msra.mxu0 0
  %1014 = vmatprep.subr.bf16.mxu0 0
  %1015 = vmatpush1.bf16.msra.mxu0 0
  %1016 = vmatprep.subr.bf16.mxu0 0
  %1017 = vmatpush1.bf16.msra.mxu0 0
  %1018 = vmatprep.subr.bf16.mxu0 0
  %1019 = vmatpush1.bf16.msra.mxu0 0
  %1020 = vmatprep.subr.bf16.mxu0 0
  %1021 = vmatpush1.bf16.msra.mxu0 0
  %1022 = vmatprep.subr.bf16.mxu0 0
  %1023 = vmatpush1.bf16.msra.mxu0 0
  %1024 = vmatprep.subr.bf16.mxu0 0
  %1025 = vmatpush1.bf16.msra.mxu0 %v261
  %1026 = vmatprep.subr.bf16.mxu0 0
  %1027 = vmatpush1.bf16.msra.mxu0 %v260
  %1028 = vmatprep.subr.bf16.mxu0 0
  %1029 = vmatpush2.bf16.msra.mxu0 0
  %1030 = vmatprep.subr.bf16.mxu0 0
  %1031 = vmatpush2.bf16.msra.mxu0 0
  %1032 = vmatprep.subr.bf16.mxu0 0
  %1033 = vmatpush2.bf16.msra.mxu0 0
  %1034 = vmatprep.subr.bf16.mxu0 0
  %1035 = vmatpush2.bf16.msra.mxu0 0
  %1036 = vmatprep.subr.bf16.mxu0 0
  %1037 = vmatpush2.bf16.msra.mxu0 0
  %1038 = vmatprep.subr.bf16.mxu0 0
  %1039 = vmatpush2.bf16.msra.mxu0 0
  %1040 = vmatprep.subr.bf16.mxu0 0
  %1041 = vmatpush2.bf16.msra.mxu0 0
  %1042 = vmatprep.subr.bf16.mxu0 0
  %1043 = vmatpush2.bf16.msra.mxu0 0
  %1044 = vmatprep.mubr.bf16.mxu0 0
  %1045 = vmatmul.mubr.bf16.gmra.mxu0 %v1010
  %v1046 = vpop.f32.mrf.mxu0
  %v1047 = vadd.f32 0.0, %v1046
  %v1048 = vpop.f32.mrf.mxu0
  %v1049 = vpop.f32.mrf.mxu0
  %v1050 = vpop.f32.mrf.mxu0
  %1051 = vdwg.mxu0
  %1053 = vrot.lane.b32.xlu0 %v1004, 32
  %v1054 = vpop.permute.xlu0 %1053
  %v1056 = vsel %vm182, %v1054, 0
  %1058 = vmatprep.subr.bf16.mxu0 0
  %1059 = vmatpush1.bf16.msra.mxu0 0
  %1060 = vmatprep.subr.bf16.mxu0 0
  %1061 = vmatpush1.bf16.msra.mxu0 0
  %1062 = vmatprep.subr.bf16.mxu0 0
  %1063 = vmatpush1.bf16.msra.mxu0 0
  %1064 = vmatprep.subr.bf16.mxu0 0
  %1065 = vmatpush1.bf16.msra.mxu0 0
  %1066 = vmatprep.subr.bf16.mxu0 0
  %1067 = vmatpush1.bf16.msra.mxu0 0
  %1068 = vmatprep.subr.bf16.mxu0 0
  %1069 = vmatpush1.bf16.msra.mxu0 0
  %1070 = vmatprep.subr.bf16.mxu0 0
  %1071 = vmatpush1.bf16.msra.mxu0 %v316
  %1072 = vmatprep.subr.bf16.mxu0 0
  %1073 = vmatpush1.bf16.msra.mxu0 %v315
  %1074 = vmatprep.subr.bf16.mxu0 0
  %1075 = vmatpush2.bf16.msra.mxu0 0
  %1076 = vmatprep.subr.bf16.mxu0 0
  %1077 = vmatpush2.bf16.msra.mxu0 0
  %1078 = vmatprep.subr.bf16.mxu0 0
  %1079 = vmatpush2.bf16.msra.mxu0 0
  %1080 = vmatprep.subr.bf16.mxu0 0
  %1081 = vmatpush2.bf16.msra.mxu0 0
  %1082 = vmatprep.subr.bf16.mxu0 0
  %1083 = vmatpush2.bf16.msra.mxu0 0
  %1084 = vmatprep.subr.bf16.mxu0 0
  %1085 = vmatpush2.bf16.msra.mxu0 0
  %1086 = vmatprep.subr.bf16.mxu0 0
  %1087 = vmatpush2.bf16.msra.mxu0 0
  %1088 = vmatprep.subr.bf16.mxu0 0
  %1089 = vmatpush2.bf16.msra.mxu0 0
  %1090 = vmatprep.mubr.bf16.mxu0 0
  %1091 = vmatmul.mubr.bf16.gmra.mxu0 %v1056
  %v1092 = vpop.f32.mrf.mxu0
  %v1093 = vadd.f32 %v1047, %v1092
  %v1094 = vpop.f32.mrf.mxu0
  %v1095 = vpop.f32.mrf.mxu0
  %v1096 = vpop.f32.mrf.mxu0
  %1097 = vdwg.mxu0
  %v1098 = vadd.f32 %v1093, %v168
  %v1099 = vxor.u32 %v1098, 2147483648
  %v1100 = vmul.f32 %v1099, 1.442695
  %v1101 = vpow.pop %v1100
  %v1102 = vadd.f32 %v1101, 1.0
  %v1103 = vrcp.pop %v1102
  %v1104 = vmul.f32 1.0, %v1103
  %v1105 = vtanh.pop %v1098
  %v1106 = vmul.f32 %v1104, %v932
  %1108 = vrot.lane.b32.xlu0 %v1105, 64
  %v1109 = vpop.permute.xlu0 %1108
  %v1111 = vmul.f32 %v1104, %v1109
  %1113 = vrot.lane.b32.xlu0 %v1111, 32
  %v1114 = vpop.permute.xlu0 %1113
  %v1116 = vadd.f32 %v1106, %v1114
  %v1117 = vtanh.pop %v1116
  %1119 = vrot.lane.b32.xlu0 %v1117, 64
  %v1120 = vpop.permute.xlu0 %1119
  %v1122 = vmul.f32 %v1104, %v1120
  %1123 = vmatprep.subr.bf16.mxu0 0
  %1124 = vmatpush1.bf16.msra.mxu0 0
  %1125 = vmatprep.subr.bf16.mxu0 0
  %1126 = vmatpush1.bf16.msra.mxu0 0
  %1127 = vmatprep.subr.bf16.mxu0 0
  %1128 = vmatpush1.bf16.msra.mxu0 0
  %1129 = vmatprep.subr.bf16.mxu0 0
  %1130 = vmatpush1.bf16.msra.mxu0 0
  %1131 = vmatprep.subr.bf16.mxu0 0
  %1132 = vmatpush1.bf16.msra.mxu0 0
  %1133 = vmatprep.subr.bf16.mxu0 0
  %1134 = vmatpush1.bf16.msra.mxu0 0
  %1135 = vmatprep.subr.bf16.mxu0 0
  %1136 = vmatpush1.bf16.msra.mxu0 %v179
  %1137 = vmatprep.subr.bf16.mxu0 0
  %1138 = vmatpush1.bf16.msra.mxu0 %v178
  %1139 = vmatprep.subr.bf16.mxu0 0
  %1140 = vmatpush2.bf16.msra.mxu0 0
  %1141 = vmatprep.subr.bf16.mxu0 0
  %1142 = vmatpush2.bf16.msra.mxu0 0
  %1143 = vmatprep.subr.bf16.mxu0 0
  %1144 = vmatpush2.bf16.msra.mxu0 0
  %1145 = vmatprep.subr.bf16.mxu0 0
  %1146 = vmatpush2.bf16.msra.mxu0 0
  %1147 = vmatprep.subr.bf16.mxu0 0
  %1148 = vmatpush2.bf16.msra.mxu0 0
  %1149 = vmatprep.subr.bf16.mxu0 0
  %1150 = vmatpush2.bf16.msra.mxu0 0
  %1151 = vmatprep.subr.bf16.mxu0 0
  %1152 = vmatpush2.bf16.msra.mxu0 0
  %1153 = vmatprep.subr.bf16.mxu0 0
  %1154 = vmatpush2.bf16.msra.mxu0 0
  %1155 = vmatprep.mubr.bf16.mxu0 0
  %1156 = vmatmul.mubr.bf16.gmra.mxu0 %v1056
  %v1157 = vpop.f32.mrf.mxu0
  %v1158 = vadd.f32 0.0, %v1157
  %v1159 = vpop.f32.mrf.mxu0
  %v1160 = vpop.f32.mrf.mxu0
  %v1161 = vpop.f32.mrf.mxu0
  %1162 = vdwg.mxu0
  %v1163 = vadd.f32 %v140, %v1158
  %v1164 = vxor.u32 %v1163, 2147483648
  %v1165 = vmul.f32 %v1164, 1.442695
  %v1166 = vpow.pop %v1165
  %v1167 = vadd.f32 %v1166, 1.0
  %v1168 = vrcp.pop %v1167
  %v1169 = vmul.f32 1.0, %v1168
  %v1170 = vtanh.pop %v1163
  %v1171 = vmul.f32 %v1169, %v997
  %1173 = vrot.lane.b32.xlu0 %v1170, 64
  %v1174 = vpop.permute.xlu0 %1173
  %v1176 = vmul.f32 %v1169, %v1174
  %1178 = vrot.lane.b32.xlu0 %v1176, 32
  %v1179 = vpop.permute.xlu0 %1178
  %v1181 = vadd.f32 %v1171, %v1179
  %v1182 = vtanh.pop %v1181
  %1184 = vrot.lane.b32.xlu0 %v1182, 64
  %v1185 = vpop.permute.xlu0 %1184
  %v1187 = vmul.f32 %v1169, %v1185
  %v1188 = vpack.c.bf16 %v1187, %v1187
  %v1189 = vpack.c.bf16 %v1122, %v1122
  %1191 = vrot.lane.b32.xlu0 %v1189, 32
  %v1192 = vpop.permute.xlu0 %1191
  %v1194 = vsel %vm182, %v1192, 0
  %1196 = vmatprep.subr.bf16.mxu0 0
  %1197 = vmatpush1.bf16.msra.mxu0 0
  %1198 = vmatprep.subr.bf16.mxu0 0
  %1199 = vmatpush1.bf16.msra.mxu0 0
  %1200 = vmatprep.subr.bf16.mxu0 0
  %1201 = vmatpush1.bf16.msra.mxu0 0
  %1202 = vmatprep.subr.bf16.mxu0 0
  %1203 = vmatpush1.bf16.msra.mxu0 0
  %1204 = vmatprep.subr.bf16.mxu0 0
  %1205 = vmatpush1.bf16.msra.mxu0 0
  %1206 = vmatprep.subr.bf16.mxu0 0
  %1207 = vmatpush1.bf16.msra.mxu0 0
  %1208 = vmatprep.subr.bf16.mxu0 0
  %1209 = vmatpush1.bf16.msra.mxu0 %v261
  %1210 = vmatprep.subr.bf16.mxu0 0
  %1211 = vmatpush1.bf16.msra.mxu0 %v260
  %1212 = vmatprep.subr.bf16.mxu0 0
  %1213 = vmatpush2.bf16.msra.mxu0 0
  %1214 = vmatprep.subr.bf16.mxu0 0
  %1215 = vmatpush2.bf16.msra.mxu0 0
  %1216 = vmatprep.subr.bf16.mxu0 0
  %1217 = vmatpush2.bf16.msra.mxu0 0
  %1218 = vmatprep.subr.bf16.mxu0 0
  %1219 = vmatpush2.bf16.msra.mxu0 0
  %1220 = vmatprep.subr.bf16.mxu0 0
  %1221 = vmatpush2.bf16.msra.mxu0 0
  %1222 = vmatprep.subr.bf16.mxu0 0
  %1223 = vmatpush2.bf16.msra.mxu0 0
  %1224 = vmatprep.subr.bf16.mxu0 0
  %1225 = vmatpush2.bf16.msra.mxu0 0
  %1226 = vmatprep.subr.bf16.mxu0 0
  %1227 = vmatpush2.bf16.msra.mxu0 0
  %1228 = vmatprep.mubr.bf16.mxu0 0
  %1229 = vmatmul.mubr.bf16.gmra.mxu0 %v1194
  %v1230 = vpop.f32.mrf.mxu0
  %v1231 = vadd.f32 0.0, %v1230
  %v1232 = vpop.f32.mrf.mxu0
  %v1233 = vpop.f32.mrf.mxu0
  %v1234 = vpop.f32.mrf.mxu0
  %1235 = vdwg.mxu0
  %1237 = vrot.lane.b32.xlu0 %v1188, 32
  %v1238 = vpop.permute.xlu0 %1237
  %v1240 = vsel %vm182, %v1238, 0
  %1242 = vmatprep.subr.bf16.mxu0 0
  %1243 = vmatpush1.bf16.msra.mxu0 0
  %1244 = vmatprep.subr.bf16.mxu0 0
  %1245 = vmatpush1.bf16.msra.mxu0 0
  %1246 = vmatprep.subr.bf16.mxu0 0
  %1247 = vmatpush1.bf16.msra.mxu0 0
  %1248 = vmatprep.subr.bf16.mxu0 0
  %1249 = vmatpush1.bf16.msra.mxu0 0
  %1250 = vmatprep.subr.bf16.mxu0 0
  %1251 = vmatpush1.bf16.msra.mxu0 0
  %1252 = vmatprep.subr.bf16.mxu0 0
  %1253 = vmatpush1.bf16.msra.mxu0 0
  %1254 = vmatprep.subr.bf16.mxu0 0
  %1255 = vmatpush1.bf16.msra.mxu0 %v316
  %1256 = vmatprep.subr.bf16.mxu0 0
  %1257 = vmatpush1.bf16.msra.mxu0 %v315
  %1258 = vmatprep.subr.bf16.mxu0 0
  %1259 = vmatpush2.bf16.msra.mxu0 0
  %1260 = vmatprep.subr.bf16.mxu0 0
  %1261 = vmatpush2.bf16.msra.mxu0 0
  %1262 = vmatprep.subr.bf16.mxu0 0
  %1263 = vmatpush2.bf16.msra.mxu0 0
  %1264 = vmatprep.subr.bf16.mxu0 0
  %1265 = vmatpush2.bf16.msra.mxu0 0
  %1266 = vmatprep.subr.bf16.mxu0 0
  %1267 = vmatpush2.bf16.msra.mxu0 0
  %1268 = vmatprep.subr.bf16.mxu0 0
  %1269 = vmatpush2.bf16.msra.mxu0 0
  %1270 = vmatprep.subr.bf16.mxu0 0
  %1271 = vmatpush2.bf16.msra.mxu0 0
  %1272 = vmatprep.subr.bf16.mxu0 0
  %1273 = vmatpush2.bf16.msra.mxu0 0
  %1274 = vmatprep.mubr.bf16.mxu0 0
  %1275 = vmatmul.mubr.bf16.gmra.mxu0 %v1240
  %v1276 = vpop.f32.mrf.mxu0
  %v1277 = vadd.f32 %v1231, %v1276
  %v1278 = vpop.f32.mrf.mxu0
  %v1279 = vpop.f32.mrf.mxu0
  %v1280 = vpop.f32.mrf.mxu0
  %1281 = vdwg.mxu0
  %v1282 = vadd.f32 %v1277, %v168
  %v1283 = vxor.u32 %v1282, 2147483648
  %v1284 = vmul.f32 %v1283, 1.442695
  %v1285 = vpow.pop %v1284
  %v1286 = vadd.f32 %v1285, 1.0
  %v1287 = vrcp.pop %v1286
  %v1288 = vmul.f32 1.0, %v1287
  %v1289 = vtanh.pop %v1282
  %v1290 = vmul.f32 %v1288, %v1116
  %1292 = vrot.lane.b32.xlu0 %v1289, 64
  %v1293 = vpop.permute.xlu0 %1292
  %v1295 = vmul.f32 %v1288, %v1293
  %1297 = vrot.lane.b32.xlu0 %v1295, 32
  %v1298 = vpop.permute.xlu0 %1297
  %v1300 = vadd.f32 %v1290, %v1298
  %v1301 = vtanh.pop %v1300
  %1303 = vrot.lane.b32.xlu0 %v1301, 64
  %v1304 = vpop.permute.xlu0 %1303
  %v1306 = vmul.f32 %v1288, %v1304
  %1307 = vmatprep.subr.bf16.mxu0 0
  %1308 = vmatpush1.bf16.msra.mxu0 0
  %1309 = vmatprep.subr.bf16.mxu0 0
  %1310 = vmatpush1.bf16.msra.mxu0 0
  %1311 = vmatprep.subr.bf16.mxu0 0
  %1312 = vmatpush1.bf16.msra.mxu0 0
  %1313 = vmatprep.subr.bf16.mxu0 0
  %1314 = vmatpush1.bf16.msra.mxu0 0
  %1315 = vmatprep.subr.bf16.mxu0 0
  %1316 = vmatpush1.bf16.msra.mxu0 0
  %1317 = vmatprep.subr.bf16.mxu0 0
  %1318 = vmatpush1.bf16.msra.mxu0 0
  %1319 = vmatprep.subr.bf16.mxu0 0
  %1320 = vmatpush1.bf16.msra.mxu0 %v179
  %1321 = vmatprep.subr.bf16.mxu0 0
  %1322 = vmatpush1.bf16.msra.mxu0 %v178
  %1323 = vmatprep.subr.bf16.mxu0 0
  %1324 = vmatpush2.bf16.msra.mxu0 0
  %1325 = vmatprep.subr.bf16.mxu0 0
  %1326 = vmatpush2.bf16.msra.mxu0 0
  %1327 = vmatprep.subr.bf16.mxu0 0
  %1328 = vmatpush2.bf16.msra.mxu0 0
  %1329 = vmatprep.subr.bf16.mxu0 0
  %1330 = vmatpush2.bf16.msra.mxu0 0
  %1331 = vmatprep.subr.bf16.mxu0 0
  %1332 = vmatpush2.bf16.msra.mxu0 0
  %1333 = vmatprep.subr.bf16.mxu0 0
  %1334 = vmatpush2.bf16.msra.mxu0 0
  %1335 = vmatprep.subr.bf16.mxu0 0
  %1336 = vmatpush2.bf16.msra.mxu0 0
  %1337 = vmatprep.subr.bf16.mxu0 0
  %1338 = vmatpush2.bf16.msra.mxu0 0
  %1339 = vmatprep.mubr.bf16.mxu0 0
  %1340 = vmatmul.mubr.bf16.gmra.mxu0 %v1240
  %v1341 = vpop.f32.mrf.mxu0
  %v1342 = vadd.f32 0.0, %v1341
  %v1343 = vpop.f32.mrf.mxu0
  %v1344 = vpop.f32.mrf.mxu0
  %v1345 = vpop.f32.mrf.mxu0
  %1346 = vdwg.mxu0
  %v1347 = vadd.f32 %v145, %v1342
  %v1348 = vxor.u32 %v1347, 2147483648
  %v1349 = vmul.f32 %v1348, 1.442695
  %v1350 = vpow.pop %v1349
  %v1351 = vadd.f32 %v1350, 1.0
  %v1352 = vrcp.pop %v1351
  %v1353 = vmul.f32 1.0, %v1352
  %v1354 = vtanh.pop %v1347
  %v1355 = vmul.f32 %v1353, %v1181
  %1357 = vrot.lane.b32.xlu0 %v1354, 64
  %v1358 = vpop.permute.xlu0 %1357
  %v1360 = vmul.f32 %v1353, %v1358
  %1362 = vrot.lane.b32.xlu0 %v1360, 32
  %v1363 = vpop.permute.xlu0 %1362
  %v1365 = vadd.f32 %v1355, %v1363
  %v1366 = vtanh.pop %v1365
  %1368 = vrot.lane.b32.xlu0 %v1366, 64
  %v1369 = vpop.permute.xlu0 %1368
  %v1371 = vmul.f32 %v1353, %v1369
  %v1372 = vpack.c.bf16 %v1371, %v1371
  %v1373 = vpack.c.bf16 %v1306, %v1306
  %1375 = vrot.lane.b32.xlu0 %v1373, 32
  %v1376 = vpop.permute.xlu0 %1375
  %v1378 = vsel %vm182, %v1376, 0
  %1380 = vmatprep.subr.bf16.mxu0 0
  %1381 = vmatpush1.bf16.msra.mxu0 0
  %1382 = vmatprep.subr.bf16.mxu0 0
  %1383 = vmatpush1.bf16.msra.mxu0 0
  %1384 = vmatprep.subr.bf16.mxu0 0
  %1385 = vmatpush1.bf16.msra.mxu0 0
  %1386 = vmatprep.subr.bf16.mxu0 0
  %1387 = vmatpush1.bf16.msra.mxu0 0
  %1388 = vmatprep.subr.bf16.mxu0 0
  %1389 = vmatpush1.bf16.msra.mxu0 0
  %1390 = vmatprep.subr.bf16.mxu0 0
  %1391 = vmatpush1.bf16.msra.mxu0 0
  %1392 = vmatprep.subr.bf16.mxu0 0
  %1393 = vmatpush1.bf16.msra.mxu0 %v261
  %1394 = vmatprep.subr.bf16.mxu0 0
  %1395 = vmatpush1.bf16.msra.mxu0 %v260
  %1396 = vmatprep.subr.bf16.mxu0 0
  %1397 = vmatpush2.bf16.msra.mxu0 0
  %1398 = vmatprep.subr.bf16.mxu0 0
  %1399 = vmatpush2.bf16.msra.mxu0 0
  %1400 = vmatprep.subr.bf16.mxu0 0
  %1401 = vmatpush2.bf16.msra.mxu0 0
  %1402 = vmatprep.subr.bf16.mxu0 0
  %1403 = vmatpush2.bf16.msra.mxu0 0
  %1404 = vmatprep.subr.bf16.mxu0 0
  %1405 = vmatpush2.bf16.msra.mxu0 0
  %1406 = vmatprep.subr.bf16.mxu0 0
  %1407 = vmatpush2.bf16.msra.mxu0 0
  %1408 = vmatprep.subr.bf16.mxu0 0
  %1409 = vmatpush2.bf16.msra.mxu0 0
  %1410 = vmatprep.subr.bf16.mxu0 0
  %1411 = vmatpush2.bf16.msra.mxu0 0
  %1412 = vmatprep.mubr.bf16.mxu0 0
  %1413 = vmatmul.mubr.bf16.gmra.mxu0 %v1378
  %v1414 = vpop.f32.mrf.mxu0
  %v1415 = vadd.f32 0.0, %v1414
  %v1416 = vpop.f32.mrf.mxu0
  %v1417 = vpop.f32.mrf.mxu0
  %v1418 = vpop.f32.mrf.mxu0
  %1419 = vdwg.mxu0
  %1421 = vrot.lane.b32.xlu0 %v1372, 32
  %v1422 = vpop.permute.xlu0 %1421
  %v1424 = vsel %vm182, %v1422, 0
  %1426 = vmatprep.subr.bf16.mxu0 0
  %1427 = vmatpush1.bf16.msra.mxu0 0
  %1428 = vmatprep.subr.bf16.mxu0 0
  %1429 = vmatpush1.bf16.msra.mxu0 0
  %1430 = vmatprep.subr.bf16.mxu0 0
  %1431 = vmatpush1.bf16.msra.mxu0 0
  %1432 = vmatprep.subr.bf16.mxu0 0
  %1433 = vmatpush1.bf16.msra.mxu0 0
  %1434 = vmatprep.subr.bf16.mxu0 0
  %1435 = vmatpush1.bf16.msra.mxu0 0
  %1436 = vmatprep.subr.bf16.mxu0 0
  %1437 = vmatpush1.bf16.msra.mxu0 0
  %1438 = vmatprep.subr.bf16.mxu0 0
  %1439 = vmatpush1.bf16.msra.mxu0 %v316
  %1440 = vmatprep.subr.bf16.mxu0 0
  %1441 = vmatpush1.bf16.msra.mxu0 %v315
  %1442 = vmatprep.subr.bf16.mxu0 0
  %1443 = vmatpush2.bf16.msra.mxu0 0
  %1444 = vmatprep.subr.bf16.mxu0 0
  %1445 = vmatpush2.bf16.msra.mxu0 0
  %1446 = vmatprep.subr.bf16.mxu0 0
  %1447 = vmatpush2.bf16.msra.mxu0 0
  %1448 = vmatprep.subr.bf16.mxu0 0
  %1449 = vmatpush2.bf16.msra.mxu0 0
  %1450 = vmatprep.subr.bf16.mxu0 0
  %1451 = vmatpush2.bf16.msra.mxu0 0
  %1452 = vmatprep.subr.bf16.mxu0 0
  %1453 = vmatpush2.bf16.msra.mxu0 0
  %1454 = vmatprep.subr.bf16.mxu0 0
  %1455 = vmatpush2.bf16.msra.mxu0 0
  %1456 = vmatprep.subr.bf16.mxu0 0
  %1457 = vmatpush2.bf16.msra.mxu0 0
  %1458 = vmatprep.mubr.bf16.mxu0 0
  %1459 = vmatmul.mubr.bf16.gmra.mxu0 %v1424
  %v1460 = vpop.f32.mrf.mxu0
  %v1461 = vadd.f32 %v1415, %v1460
  %v1462 = vpop.f32.mrf.mxu0
  %v1463 = vpop.f32.mrf.mxu0
  %v1464 = vpop.f32.mrf.mxu0
  %1465 = vdwg.mxu0
  %v1466 = vadd.f32 %v1461, %v168
  %v1467 = vxor.u32 %v1466, 2147483648
  %v1468 = vmul.f32 %v1467, 1.442695
  %v1469 = vpow.pop %v1468
  %v1470 = vadd.f32 %v1469, 1.0
  %v1471 = vrcp.pop %v1470
  %v1472 = vmul.f32 1.0, %v1471
  %v1473 = vtanh.pop %v1466
  %v1474 = vmul.f32 %v1472, %v1300
  %1476 = vrot.lane.b32.xlu0 %v1473, 64
  %v1477 = vpop.permute.xlu0 %1476
  %v1479 = vmul.f32 %v1472, %v1477
  %1481 = vrot.lane.b32.xlu0 %v1479, 32
  %v1482 = vpop.permute.xlu0 %1481
  %v1484 = vadd.f32 %v1474, %v1482
  %v1485 = vtanh.pop %v1484
  %1487 = vrot.lane.b32.xlu0 %v1485, 64
  %v1488 = vpop.permute.xlu0 %1487
  %v1490 = vmul.f32 %v1472, %v1488
  %1491 = vmatprep.subr.bf16.mxu0 0
  %1492 = vmatpush1.bf16.msra.mxu0 0
  %1493 = vmatprep.subr.bf16.mxu0 0
  %1494 = vmatpush1.bf16.msra.mxu0 0
  %1495 = vmatprep.subr.bf16.mxu0 0
  %1496 = vmatpush1.bf16.msra.mxu0 0
  %1497 = vmatprep.subr.bf16.mxu0 0
  %1498 = vmatpush1.bf16.msra.mxu0 0
  %1499 = vmatprep.subr.bf16.mxu0 0
  %1500 = vmatpush1.bf16.msra.mxu0 0
  %1501 = vmatprep.subr.bf16.mxu0 0
  %1502 = vmatpush1.bf16.msra.mxu0 0
  %1503 = vmatprep.subr.bf16.mxu0 0
  %1504 = vmatpush1.bf16.msra.mxu0 %v179
  %1505 = vmatprep.subr.bf16.mxu0 0
  %1506 = vmatpush1.bf16.msra.mxu0 %v178
  %1507 = vmatprep.subr.bf16.mxu0 0
  %1508 = vmatpush2.bf16.msra.mxu0 0
  %1509 = vmatprep.subr.bf16.mxu0 0
  %1510 = vmatpush2.bf16.msra.mxu0 0
  %1511 = vmatprep.subr.bf16.mxu0 0
  %1512 = vmatpush2.bf16.msra.mxu0 0
  %1513 = vmatprep.subr.bf16.mxu0 0
  %1514 = vmatpush2.bf16.msra.mxu0 0
  %1515 = vmatprep.subr.bf16.mxu0 0
  %1516 = vmatpush2.bf16.msra.mxu0 0
  %1517 = vmatprep.subr.bf16.mxu0 0
  %1518 = vmatpush2.bf16.msra.mxu0 0
  %1519 = vmatprep.subr.bf16.mxu0 0
  %1520 = vmatpush2.bf16.msra.mxu0 0
  %1521 = vmatprep.subr.bf16.mxu0 0
  %1522 = vmatpush2.bf16.msra.mxu0 0
  %1523 = vmatprep.mubr.bf16.mxu0 0
  %1524 = vmatmul.mubr.bf16.gmra.mxu0 %v1424
  %v1525 = vpop.f32.mrf.mxu0
  %v1526 = vadd.f32 0.0, %v1525
  %v1527 = vpop.f32.mrf.mxu0
  %v1528 = vpop.f32.mrf.mxu0
  %v1529 = vpop.f32.mrf.mxu0
  %1530 = vdwg.mxu0
  %v1531 = vadd.f32 %v148, %v1526
  %v1532 = vxor.u32 %v1531, 2147483648
  %v1533 = vmul.f32 %v1532, 1.442695
  %v1534 = vpow.pop %v1533
  %v1535 = vadd.f32 %v1534, 1.0
  %v1536 = vrcp.pop %v1535
  %v1537 = vmul.f32 1.0, %v1536
  %v1538 = vtanh.pop %v1531
  %v1539 = vmul.f32 %v1537, %v1365
  %1541 = vrot.lane.b32.xlu0 %v1538, 64
  %v1542 = vpop.permute.xlu0 %1541
  %v1544 = vmul.f32 %v1537, %v1542
  %1546 = vrot.lane.b32.xlu0 %v1544, 32
  %v1547 = vpop.permute.xlu0 %1546
  %v1549 = vadd.f32 %v1539, %v1547
  %v1550 = vtanh.pop %v1549
  %1552 = vrot.lane.b32.xlu0 %v1550, 64
  %v1553 = vpop.permute.xlu0 %1552
  %v1555 = vmul.f32 %v1537, %v1553
  %v1556 = vpack.c.bf16 %v1555, %v1555
  %v1557 = vpack.c.bf16 %v1490, %v1490
  %1559 = vrot.lane.b32.xlu0 %v1557, 32
  %v1560 = vpop.permute.xlu0 %1559
  %v1562 = vsel %vm182, %v1560, 0
  %1564 = vmatprep.subr.bf16.mxu0 0
  %1565 = vmatpush1.bf16.msra.mxu0 0
  %1566 = vmatprep.subr.bf16.mxu0 0
  %1567 = vmatpush1.bf16.msra.mxu0 0
  %1568 = vmatprep.subr.bf16.mxu0 0
  %1569 = vmatpush1.bf16.msra.mxu0 0
  %1570 = vmatprep.subr.bf16.mxu0 0
  %1571 = vmatpush1.bf16.msra.mxu0 0
  %1572 = vmatprep.subr.bf16.mxu0 0
  %1573 = vmatpush1.bf16.msra.mxu0 0
  %1574 = vmatprep.subr.bf16.mxu0 0
  %1575 = vmatpush1.bf16.msra.mxu0 0
  %1576 = vmatprep.subr.bf16.mxu0 0
  %1577 = vmatpush1.bf16.msra.mxu0 %v261
  %1578 = vmatprep.subr.bf16.mxu0 0
  %1579 = vmatpush1.bf16.msra.mxu0 %v260
  %1580 = vmatprep.subr.bf16.mxu0 0
  %1581 = vmatpush2.bf16.msra.mxu0 0
  %1582 = vmatprep.subr.bf16.mxu0 0
  %1583 = vmatpush2.bf16.msra.mxu0 0
  %1584 = vmatprep.subr.bf16.mxu0 0
  %1585 = vmatpush2.bf16.msra.mxu0 0
  %1586 = vmatprep.subr.bf16.mxu0 0
  %1587 = vmatpush2.bf16.msra.mxu0 0
  %1588 = vmatprep.subr.bf16.mxu0 0
  %1589 = vmatpush2.bf16.msra.mxu0 0
  %1590 = vmatprep.subr.bf16.mxu0 0
  %1591 = vmatpush2.bf16.msra.mxu0 0
  %1592 = vmatprep.subr.bf16.mxu0 0
  %1593 = vmatpush2.bf16.msra.mxu0 0
  %1594 = vmatprep.subr.bf16.mxu0 0
  %1595 = vmatpush2.bf16.msra.mxu0 0
  %1596 = vmatprep.mubr.bf16.mxu0 0
  %1597 = vmatmul.mubr.bf16.gmra.mxu0 %v1562
  %v1598 = vpop.f32.mrf.mxu0
  %v1599 = vadd.f32 0.0, %v1598
  %v1600 = vpop.f32.mrf.mxu0
  %v1601 = vpop.f32.mrf.mxu0
  %v1602 = vpop.f32.mrf.mxu0
  %1603 = vdwg.mxu0
  %1605 = vrot.lane.b32.xlu0 %v1556, 32
  %v1606 = vpop.permute.xlu0 %1605
  %v1608 = vsel %vm182, %v1606, 0
  %1610 = vmatprep.subr.bf16.mxu0 0
  %1611 = vmatpush1.bf16.msra.mxu0 0
  %1612 = vmatprep.subr.bf16.mxu0 0
  %1613 = vmatpush1.bf16.msra.mxu0 0
  %1614 = vmatprep.subr.bf16.mxu0 0
  %1615 = vmatpush1.bf16.msra.mxu0 0
  %1616 = vmatprep.subr.bf16.mxu0 0
  %1617 = vmatpush1.bf16.msra.mxu0 0
  %1618 = vmatprep.subr.bf16.mxu0 0
  %1619 = vmatpush1.bf16.msra.mxu0 0
  %1620 = vmatprep.subr.bf16.mxu0 0
  %1621 = vmatpush1.bf16.msra.mxu0 0
  %1622 = vmatprep.subr.bf16.mxu0 0
  %1623 = vmatpush1.bf16.msra.mxu0 %v316
  %1624 = vmatprep.subr.bf16.mxu0 0
  %1625 = vmatpush1.bf16.msra.mxu0 %v315
  %1626 = vmatprep.subr.bf16.mxu0 0
  %1627 = vmatpush2.bf16.msra.mxu0 0
  %1628 = vmatprep.subr.bf16.mxu0 0
  %1629 = vmatpush2.bf16.msra.mxu0 0
  %1630 = vmatprep.subr.bf16.mxu0 0
  %1631 = vmatpush2.bf16.msra.mxu0 0
  %1632 = vmatprep.subr.bf16.mxu0 0
  %1633 = vmatpush2.bf16.msra.mxu0 0
  %1634 = vmatprep.subr.bf16.mxu0 0
  %1635 = vmatpush2.bf16.msra.mxu0 0
  %1636 = vmatprep.subr.bf16.mxu0 0
  %1637 = vmatpush2.bf16.msra.mxu0 0
  %1638 = vmatprep.subr.bf16.mxu0 0
  %1639 = vmatpush2.bf16.msra.mxu0 0
  %1640 = vmatprep.subr.bf16.mxu0 0
  %1641 = vmatpush2.bf16.msra.mxu0 0
  %1642 = vmatprep.mubr.bf16.mxu0 0
  %1643 = vmatmul.mubr.bf16.gmra.mxu0 %v1608
  %v1644 = vpop.f32.mrf.mxu0
  %v1645 = vadd.f32 %v1599, %v1644
  %v1646 = vpop.f32.mrf.mxu0
  %v1647 = vpop.f32.mrf.mxu0
  %v1648 = vpop.f32.mrf.mxu0
  %1649 = vdwg.mxu0
  %v1650 = vadd.f32 %v1645, %v168
  %v1651 = vxor.u32 %v1650, 2147483648
  %v1652 = vmul.f32 %v1651, 1.442695
  %v1653 = vpow.pop %v1652
  %v1654 = vadd.f32 %v1653, 1.0
  %v1655 = vrcp.pop %v1654
  %v1656 = vmul.f32 1.0, %v1655
  %v1657 = vtanh.pop %v1650
  %v1658 = vmul.f32 %v1656, %v1484
  %1660 = vrot.lane.b32.xlu0 %v1657, 64
  %v1661 = vpop.permute.xlu0 %1660
  %v1663 = vmul.f32 %v1656, %v1661
  %1665 = vrot.lane.b32.xlu0 %v1663, 32
  %v1666 = vpop.permute.xlu0 %1665
  %v1668 = vadd.f32 %v1658, %v1666
  %v1669 = vtanh.pop %v1668
  %1671 = vrot.lane.b32.xlu0 %v1669, 64
  %v1672 = vpop.permute.xlu0 %1671
  %v1674 = vmul.f32 %v1656, %v1672
  %v1675 = vpack.c.bf16 %v570, %v386
  %v1676 = vpack.c.bf16 %v938, %v754
  %v1677 = vpack.c.bf16 %v1306, %v1122
  %v1678 = vpack.c.bf16 %v1674, %v1490
  %v1679 = vld [vmem:[%s7] sm:$0xf]
  %v1680 = vld [vmem:[%s7 + $0x4] sm:$0xf]
  %v1681 = vld [vmem:[%s7 + $0x8] sm:$0xf]
  %v1682 = vld [vmem:[%s7 + $0xc] sm:$0xf]
  %v1683 = vld [vmem:[%s8] sm:$0x1]
  %v1685 = vlaneseq
  %v1686 = vshrl.u32 %v1685, 7
  %v1687 = vsub.s32 0, %v1686
  %v1688 = vrot.slane %v1683, %v1687
  %1694 = vrot.lane.b32.xlu0 %v1675, 32
  %v1695 = vpop.permute.xlu0 %1694
  %1696 = vrot.lane.b32.xlu0 %v1676, 32
  %v1697 = vpop.permute.xlu0 %1696
  %1698 = vrot.lane.b32.xlu0 %v1677, 32
  %v1699 = vpop.permute.xlu0 %1698
  %1700 = vrot.lane.b32.xlu0 %v1678, 32
  %v1701 = vpop.permute.xlu0 %1700
  %v1706 = vunpack.c.l.b16 %v1679
  %v1707 = vunpack.c.l.b16 %v1680
  %v1708 = vunpack.c.l.b16 %v1681
  %v1709 = vunpack.c.l.b16 %v1682
  %v1710 = vpack.c.b16 %v1707, %v1706
  %v1711 = vpack.c.b16 %v1709, %v1708
  %v1715 = vsel %vm182, %v1695, 0
  %v1718 = vsel %vm182, %v1697, 0
  %v1721 = vsel %vm182, %v1699, 0
  %v1724 = vsel %vm182, %v1701, 0
  %1726 = vmatprep.subr.bf16.mxu0 0
  %1727 = vmatpush1.bf16.msra.mxu0 0
  %1728 = vmatprep.subr.bf16.mxu0 0
  %1729 = vmatpush1.bf16.msra.mxu0 0
  %1730 = vmatprep.subr.bf16.mxu0 0
  %1731 = vmatpush1.bf16.msra.mxu0 0
  %1732 = vmatprep.subr.bf16.mxu0 0
  %1733 = vmatpush1.bf16.msra.mxu0 0
  %1734 = vmatprep.subr.bf16.mxu0 0
  %1735 = vmatpush1.bf16.msra.mxu0 0
  %1736 = vmatprep.subr.bf16.mxu0 0
  %1737 = vmatpush1.bf16.msra.mxu0 0
  %1738 = vmatprep.subr.bf16.mxu0 0
  %1739 = vmatpush1.bf16.msra.mxu0 %v1711
  %1740 = vmatprep.subr.bf16.mxu0 0
  %1741 = vmatpush1.bf16.msra.mxu0 %v1710
  %1742 = vmatprep.subr.bf16.mxu0 0
  %1743 = vmatpush2.bf16.msra.mxu0 0
  %1744 = vmatprep.subr.bf16.mxu0 0
  %1745 = vmatpush2.bf16.msra.mxu0 0
  %1746 = vmatprep.subr.bf16.mxu0 0
  %1747 = vmatpush2.bf16.msra.mxu0 0
  %1748 = vmatprep.subr.bf16.mxu0 0
  %1749 = vmatpush2.bf16.msra.mxu0 0
  %1750 = vmatprep.subr.bf16.mxu0 0
  %1751 = vmatpush2.bf16.msra.mxu0 0
  %1752 = vmatprep.subr.bf16.mxu0 0
  %1753 = vmatpush2.bf16.msra.mxu0 0
  %1754 = vmatprep.subr.bf16.mxu0 0
  %1755 = vmatpush2.bf16.msra.mxu0 0
  %1756 = vmatprep.subr.bf16.mxu0 0
  %1757 = vmatpush2.bf16.msra.mxu0 0
  %1758 = vmatprep.mubr.bf16.mxu0 0
  %1759 = vmatmul.mubr.bf16.gmra.mxu0 %v1715
  %v1760 = vpop.f32.mrf.mxu0
  %v1761 = vadd.f32 %v1688, %v1760
  %v1762 = vpop.f32.mrf.mxu0
  %v1763 = vpop.f32.mrf.mxu0
  %v1764 = vadd.f32 %v1688, %v1763
  %v1765 = vpop.f32.mrf.mxu0
  %1766 = vmatprep.mubr.bf16.mxu0 0
  %1767 = vmatmul.mubr.bf16.gmra.mxu0 %v1718
  %v1768 = vpop.f32.mrf.mxu0
  %v1769 = vadd.f32 %v1688, %v1768
  %v1770 = vpop.f32.mrf.mxu0
  %v1771 = vpop.f32.mrf.mxu0
  %v1772 = vadd.f32 %v1688, %v1771
  %v1773 = vpop.f32.mrf.mxu0
  %1774 = vmatprep.mubr.bf16.mxu0 0
  %1775 = vmatmul.mubr.bf16.gmra.mxu0 %v1721
  %v1776 = vpop.f32.mrf.mxu0
  %v1777 = vadd.f32 %v1688, %v1776
  %v1778 = vpop.f32.mrf.mxu0
  %v1779 = vpop.f32.mrf.mxu0
  %v1780 = vadd.f32 %v1688, %v1779
  %v1781 = vpop.f32.mrf.mxu0
  %1782 = vmatprep.mubr.bf16.mxu0 0
  %1783 = vmatmul.mubr.bf16.gmra.mxu0 %v1724
  %v1784 = vpop.f32.mrf.mxu0
  %v1785 = vadd.f32 %v1688, %v1784
  %v1786 = vpop.f32.mrf.mxu0
  %v1787 = vpop.f32.mrf.mxu0
  %v1788 = vadd.f32 %v1688, %v1787
  %v1789 = vpop.f32.mrf.mxu0
  %1790 = vdwg.mxu0
  %1791 = vst [vmem:[%s9] sm:$0xff] %v1761
  %1792 = vst [vmem:[%s9 + $0x8] sm:$0xff] %v1764
  %1793 = vst [vmem:[%s9 + $0x10] sm:$0xff] %v1769
  %1794 = vst [vmem:[%s9 + $0x18] sm:$0xff] %v1772
  %1795 = vst [vmem:[%s9 + $0x20] sm:$0xff] %v1777
  %1796 = vst [vmem:[%s9 + $0x28] sm:$0xff] %v1780
  %1797 = vst [vmem:[%s9 + $0x30] sm:$0xff] %v1785
  %1798 = vst [vmem:[%s9 + $0x38] sm:$0xff] %v1788
  // Predicated region
  $region38: #{lstm_reg_forward.1} parent=0 // pred_check
    _
  $region39: #{lstm_reg_forward.1} parent=0 // pred_check_branch
    %1800 = sbr.rel (0) target = $region41
  $region40: #{lstm_reg_forward.1} parent=0 // pred_region
    _
  $region41: #{lstm_reg_forward.1} parent=0 // pred_fallthru
    _
  // Predicated region
  $region42: #{lstm_reg_forward.1} parent=0 // pred_check
    _
  $region43: #{lstm_reg_forward.1} parent=0 // pred_check_branch
    %1802 = sbr.rel (0) target = $region45
  $region44: #{lstm_reg_forward.1} parent=0 // pred_region
    _
  $region45: #{lstm_reg_forward.1} parent=0 // pred_fallthru
    _

</llo_original>
